<compile_context>
chip_gen: v6e
topology: v6e:2x2x1
jax: 0.10.0
libtpu: 0.0.40
codegen_flags: <defaults>
</compile_context>

<pallas_src>
import functools

import jax
import jax.numpy as jnp
from jax.experimental import pallas as pl
from jax.experimental.pallas import tpu as pltpu


def _round_up(a, b):
    return ((a + b - 1) // b) * b


def _vmem_capacity_bytes():
    """Physical VMEM per TensorCore (trace-time query, conservative fallback)."""
    try:
        info = pltpu.get_tpu_info()
        cap = int(getattr(info, "vmem_capacity_bytes", 0))
        if cap > 0:
            return cap
    except Exception:
        pass
    return 64 * 1024 * 1024  # v7x per-TC physical VMEM (the smallest of v5e/v6e/v7x)


def _kg_kernel(z_ref, a_ref, coef_ref, o_ref):
    """coef_k * exp(z^T (-0.5*inv(cov_k)) z) for one (K-tile, N-tile) output block.

    Layout: N (points) on the lane axis, K (components) on the sublane axis.

    z_ref:    (D, TN)      transposed z = y - x; z_ref[i, :] is a full lane vector
    a_ref:    (TK, NPAIR)  packed upper triangle of -0.5*inv(cov_k), off-diag doubled
    coef_ref: (TK, 1)      scale_k * normalization_k
    o_ref:    (TK, TN)     output tile
    """
    z = z_ref[...].astype(jnp.float32)        # (D, TN)
    a = a_ref[...].astype(jnp.float32)        # (TK, NPAIR)
    coef = coef_ref[...].astype(jnp.float32)  # (TK, 1)

    d, tn = z.shape
    tk = a.shape[0]

    # Q[k, n] = sum_{i<=j} A[k, pair(i,j)] * z[i, n] * z[j, n]
    # (A holds -0.5*inv(cov) with off-diagonal terms doubled, cov symmetric.)
    # D is tiny (e.g. 2): unroll on the VPU; (TK,1)*(1,TN) broadcasts are dense FMAs.
    q = jnp.zeros((tk, tn), dtype=jnp.float32)
    col = 0
    for i in range(d):
        zi = z[i:i + 1, :]                    # (1, TN), lane-dense
        for j in range(i, d):
            zz = zi * z[j:j + 1, :]           # (1, TN)
            q = q + a[:, col:col + 1] * zz    # (TK,1)*(1,TN) -> (TK,TN)
            col += 1

    o_ref[...] = (coef * jnp.exp(q)).astype(o_ref.dtype)


@functools.partial(
    jax.jit,
    static_argnames=("normalize", "tile_n", "k_tile", "out_dtype", "f_major_output"),
)
def k_g_forward(x, y, scale, cov, normalize=True, tile_n=65536, k_tile=512,
                out_dtype=jnp.float32, f_major_output=False):
    """Pallas implementation of K_g.forward(x, y).

    x:     (..., D) float32 points
    y:     scalar or array broadcastable against x
    scale: broadcastable to F_shape = cov.shape[:-2]
    cov:   (*F_shape, D, D) symmetric PSD matrices (symmetry is assumed, as in the
           PyTorch module's __init__ assertion)
    returns: (*x.shape[:-1], *F_shape) by default; if f_major_output=True, returns
             (*F_shape, *x.shape[:-1]) and skips a full HBM transpose pass.
    """
    d = cov.shape[-1]
    f_shape = cov.shape[:-2]
    k = 1
    for s in f_shape:
        k *= s
    npair = d * (d + 1) // 2

    # ---- glue: tiny per-component precompute in plain JAX ----
    cov_flat = cov.reshape(k, d, d).astype(jnp.float32)
    inv_cov = jnp.linalg.inv(cov_flat)                        # (K, D, D)
    neg_half = -0.5 * inv_cov
    # cov (hence inv(cov)) is symmetric: pack the upper triangle with doubled
    # off-diagonals -> D*(D+1)/2 FMAs per output element instead of D*D.
    cols = []
    for i in range(d):
        for j in range(i, d):
            w = 1.0 if i == j else 2.0
            cols.append(w * neg_half[:, i, j])
    a_mat = jnp.stack(cols, axis=1)                           # (K, NPAIR)

    if normalize:
        det = jnp.linalg.det(cov_flat)                        # (K,)
        norm = 1.0 / jnp.sqrt(((2.0 * jnp.pi) ** d) * det)    # (K,)
    else:
        norm = jnp.ones((k,), dtype=jnp.float32)
    scale_flat = jnp.broadcast_to(jnp.asarray(scale, jnp.float32), f_shape).reshape(k)
    coef = (scale_flat * norm).reshape(k, 1)                  # (K, 1)

    # ---- K tiling (second grid axis) ----
    if k <= k_tile:
        tk = k                      # single K block; tk == full dim, any K allowed
        k_pad = k
    else:
        tk = _round_up(min(k_tile, k), 8)   # sublane granularity
        k_pad = _round_up(k, tk)
    if k_pad != k:
        # Padded rows: a=0 -> q=0, coef=0 -> output 0; sliced off below. Tiny copy.
        a_mat = jnp.pad(a_mat, ((0, k_pad - k), (0, 0)))
        coef = jnp.pad(coef, ((0, k_pad - k), (0, 0)))
    grid_k = k_pad // tk

    # z = y - x, transposed to (D, N) so points sit on the lane axis.
    z = jnp.asarray(y, x.dtype) - x
    input_shape = z.shape[:-1]
    z_t = z.reshape(-1, d).astype(jnp.float32).T              # (D, N)
    n = z_t.shape[1]

    # ---- N tile sizing against per-generation VMEM ----
    vmem_cap = _vmem_capacity_bytes()
    vmem_budget = vmem_cap // 4            # working-set target (headroom for Mosaic scratch)
    out_itemsize = jnp.dtype(out_dtype).itemsize
    bytes_per_col = 2 * (4 * d + out_itemsize * tk)   # double-buffered z + out per point
    max_tile = max(128, (vmem_budget // bytes_per_col) // 128 * 128)
    # Keep >= ~8 grid steps along N so v7x's 2 TensorCores both get work and the
    # pipeline has enough steps for DMA/compute overlap.
    tile_for_steps = max(128, _round_up(pl.cdiv(n, 8), 128))
    tile = max(128, min(tile_n, max_tile, tile_for_steps))
    grid_n = pl.cdiv(n, tile)              # partial last block handled by Pallas masking

    # TODO(synk): on v7x with small per-step DMA, consider pipeline_mode=pl.Buffered(3)
    # on the z/out BlockSpecs to hide DMA issue latency.
    grid = (grid_k, grid_n)                # N innermost: a/coef blocks stay resident per K-tile
    out = pl.pallas_call(
        _kg_kernel,
        out_shape=jax.ShapeDtypeStruct((k_pad, n), out_dtype),
        grid_spec=pltpu.PrefetchScalarGridSpec(
            num_scalar_prefetch=0,
            grid=grid,
            in_specs=[
                pl.BlockSpec((d, tile), lambda ik, in_: (0, in_)),      # z tile (lane-dense)
                pl.BlockSpec((tk, npair), lambda ik, in_: (ik, 0)),     # packed -0.5*inv(cov)
                pl.BlockSpec((tk, 1), lambda ik, in_: (ik, 0)),         # coefficients
            ],
            out_specs=pl.BlockSpec((tk, tile), lambda ik, in_: (ik, in_)),
        ),
        compiler_params=pltpu.CompilerParams(
            dimension_semantics=("parallel", "parallel"),   # both axes independent
            vmem_limit_bytes=vmem_cap // 2,                 # raise scoped limit safely
        ),
    )(z_t, a_mat, coef)

    out = out[:k, :]                                          # drop K padding rows
    if f_major_output:
        # Skips the extra full-HBM transpose pass; consumer gets F-major layout.
        return out.reshape(*f_shape, *input_shape)
    # Default: match the PyTorch module's (*input_shape, *F_shape) layout.
    return out.T.reshape(*input_shape, *f_shape)


def _reference(x, y, scale, cov, normalize=True):
    """Pure-JAX reference mirroring the PyTorch forward."""
    d = cov.shape[-1]
    f_shape = cov.shape[:-2]
    z = jnp.asarray(y, x.dtype) - x
    input_shape = z.shape[:-1]
    cov_flat = cov.reshape(-1, d, d)
    result = jnp.exp(-0.5 * jnp.einsum('...i,kij,...j->...k', z,
                                       jnp.linalg.inv(cov_flat), z))
    if normalize:
        result = result / jnp.sqrt(((2.0 * jnp.pi) ** d) * jnp.linalg.det(cov_flat))
    result = jnp.broadcast_to(jnp.asarray(scale, jnp.float32), f_shape) * \
        result.reshape(*input_shape, *f_shape)
    return result


if __name__ == "__main__":
    key = jax.random.PRNGKey(0)
    k_x, k_cov, k_scale, k_cov2, k_x2 = jax.random.split(key, 5)

    # ---- Test 1: small K (no K-tiling), D=2, F_shape=(3,), N = 32*64 = 2048 ----
    D = 2
    F = 3
    b = jax.random.normal(k_cov, (F, D, D), dtype=jnp.float32)
    cov = jnp.einsum('kij,klj->kil', b, b) + 0.5 * jnp.eye(D, dtype=jnp.float32)
    scale = 1.0 + 0.1 * jax.random.normal(k_scale, (F,), dtype=jnp.float32)
    x = jax.random.normal(k_x, (32, 64, D), dtype=jnp.float32)
    y = 0.0

    out = jax.block_until_ready(k_g_forward(x, y, scale, cov, normalize=True))
    ref = _reference(x, y, scale, cov, normalize=True)
    assert out.shape == (32, 64, F), out.shape
    assert jnp.allclose(out, ref, atol=1e-5, rtol=1e-5), \
        float(jnp.max(jnp.abs(out - ref)))

    # ---- Test 2: multi-dim F_shape, K-tiling exercised (k_tile=8 -> K grid axis),
    #      scale broadcast (6,)->(4,6), un-normalized, N=153 (partial last N tile) ----
    F2 = (4, 6)
    b2 = jax.random.normal(k_cov2, (*F2, D, D), dtype=jnp.float32)
    cov2 = jnp.einsum('...ij,...lj->...il', b2, b2) + 0.5 * jnp.eye(D, dtype=jnp.float32)
    scale2 = jnp.full((6,), 0.7, dtype=jnp.float32)
    x2 = jax.random.normal(k_x2, (17, 9, D), dtype=jnp.float32)
    out2 = jax.block_until_ready(
        k_g_forward(x2, 0.0, scale2, cov2, normalize=False, k_tile=8))
    ref2 = _reference(x2, 0.0, scale2, cov2, normalize=False)
    assert out2.shape == (17, 9, *F2), out2.shape
    assert jnp.allclose(out2, ref2, atol=1e-5, rtol=1e-5), \
        float(jnp.max(jnp.abs(out2 - ref2)))

    print("KERNEL_OK")
</pallas_src>

<mosaic_0001>
module attributes {stable_mosaic.version = 11 : i64} {
  func.func @_kg_kernel(%arg0: i32, %arg1: i32, %arg2: memref<2x256xf32, #tpu.memory_space<vmem>>, %arg3: memref<3x3xf32, #tpu.memory_space<vmem>>, %arg4: memref<3x1xf32, #tpu.memory_space<vmem>>, %arg5: memref<3x256xf32, #tpu.memory_space<vmem>>) attributes {dimension_semantics = [#tpu.dimension_semantics<parallel>, #tpu.dimension_semantics<parallel>], iteration_bounds = array<i64: 1, 8>, scalar_prefetch = 0 : i64, scratch_operands = 0 : i64, tpu.core_type = #tpu.core_type<tc>, window_params = [{transform_indices = @transform_0, window_bounds = array<i64: 2, 256>}, {transform_indices = @transform_1, window_bounds = array<i64: 3, 3>}, {transform_indices = @transform_2, window_bounds = array<i64: 3, 1>}, {transform_indices = @transform_3, window_bounds = array<i64: 3, 256>}]} {
    %c0 = arith.constant 0 : index
    %c0_0 = arith.constant 0 : index
    %0 = vector.load %arg2[%c0, %c0_0] : memref<2x256xf32, #tpu.memory_space<vmem>>, vector<2x256xf32>
    %c0_1 = arith.constant 0 : index
    %c0_2 = arith.constant 0 : index
    %1 = vector.load %arg3[%c0_1, %c0_2] : memref<3x3xf32, #tpu.memory_space<vmem>>, vector<3x3xf32>
    %c0_3 = arith.constant 0 : index
    %c0_4 = arith.constant 0 : index
    %2 = vector.load %arg4[%c0_3, %c0_4] : memref<3x1xf32, #tpu.memory_space<vmem>>, vector<3x1xf32>
    %cst = arith.constant 0.000000e+00 : f32
    %3 = vector.broadcast %cst : f32 to vector<3x256xf32>
    %4 = vector.extract_strided_slice %0 {offsets = [0, 0], sizes = [1, 256], strides = [1, 1]} : vector<2x256xf32> to vector<1x256xf32>
    %5 = vector.extract_strided_slice %0 {offsets = [0, 0], sizes = [1, 256], strides = [1, 1]} : vector<2x256xf32> to vector<1x256xf32>
    %6 = arith.mulf %4, %5 : vector<1x256xf32>
    %7 = vector.extract_strided_slice %1 {offsets = [0, 0], sizes = [3, 1], strides = [1, 1]} : vector<3x3xf32> to vector<3x1xf32>
    %8 = vector.broadcast %7 : vector<3x1xf32> to vector<3x256xf32>
    %9 = vector.broadcast %6 : vector<1x256xf32> to vector<3x256xf32>
    %10 = arith.mulf %8, %9 : vector<3x256xf32>
    %11 = arith.addf %3, %10 : vector<3x256xf32>
    %12 = vector.extract_strided_slice %0 {offsets = [1, 0], sizes = [1, 256], strides = [1, 1]} : vector<2x256xf32> to vector<1x256xf32>
    %13 = arith.mulf %4, %12 : vector<1x256xf32>
    %14 = vector.extract_strided_slice %1 {offsets = [0, 1], sizes = [3, 1], strides = [1, 1]} : vector<3x3xf32> to vector<3x1xf32>
    %15 = vector.broadcast %14 : vector<3x1xf32> to vector<3x256xf32>
    %16 = vector.broadcast %13 : vector<1x256xf32> to vector<3x256xf32>
    %17 = arith.mulf %15, %16 : vector<3x256xf32>
    %18 = arith.addf %11, %17 : vector<3x256xf32>
    %19 = vector.extract_strided_slice %0 {offsets = [1, 0], sizes = [1, 256], strides = [1, 1]} : vector<2x256xf32> to vector<1x256xf32>
    %20 = vector.extract_strided_slice %0 {offsets = [1, 0], sizes = [1, 256], strides = [1, 1]} : vector<2x256xf32> to vector<1x256xf32>
    %21 = arith.mulf %19, %20 : vector<1x256xf32>
    %22 = vector.extract_strided_slice %1 {offsets = [0, 2], sizes = [3, 1], strides = [1, 1]} : vector<3x3xf32> to vector<3x1xf32>
    %23 = vector.broadcast %22 : vector<3x1xf32> to vector<3x256xf32>
    %24 = vector.broadcast %21 : vector<1x256xf32> to vector<3x256xf32>
    %25 = arith.mulf %23, %24 : vector<3x256xf32>
    %26 = arith.addf %18, %25 : vector<3x256xf32>
    %27 = math.exp %26 : vector<3x256xf32>
    %28 = vector.broadcast %2 : vector<3x1xf32> to vector<3x256xf32>
    %29 = arith.mulf %28, %27 : vector<3x256xf32>
    %c0_5 = arith.constant 0 : index
    %c0_6 = arith.constant 0 : index
    %30 = vector.load %arg5[%c0_5, %c0_6] : memref<3x256xf32, #tpu.memory_space<vmem>>, vector<3x256xf32>
    tpu.vector_store %arg5[%c0_5, %c0_6], %29 {strides = array<i32>} : memref<3x256xf32, #tpu.memory_space<vmem>>, vector<3x256xf32>,
    return
  }
  func.func @transform_0(%arg0: i32, %arg1: i32) -> (i32, i32) {
    %c0_i32 = arith.constant 0 : i32
    %c0_i32_0 = arith.constant 0 : i32
    return %c0_i32, %arg1 : i32, i32
  }
  func.func @transform_1(%arg0: i32, %arg1: i32) -> (i32, i32) {
    %c0_i32 = arith.constant 0 : i32
    %c0_i32_0 = arith.constant 0 : i32
    return %arg0, %c0_i32 : i32, i32
  }
  func.func @transform_2(%arg0: i32, %arg1: i32) -> (i32, i32) {
    %c0_i32 = arith.constant 0 : i32
    %c0_i32_0 = arith.constant 0 : i32
    return %arg0, %c0_i32 : i32, i32
  }
  func.func @transform_3(%arg0: i32, %arg1: i32) -> (i32, i32) {
    %c0_i32 = arith.constant 0 : i32
    return %arg0, %arg1 : i32, i32
  }
}

</mosaic_0001>

<llo_original>
// kernel: custom-call.11
$region0: #{custom-call.11}
  %s0 = inlined_call_operand.vmem [shape: f32[3,2,2], index: 0, kind: input, shape index: {}]
  %s1 = inlined_call_operand.vmem [shape: f32[3,2,2], index: 1, kind: output, shape index: {0}]
  %s2 = inlined_call_operand.hbm [shape: s32[3,2], index: 2, kind: output, shape index: {1}]
  %s3 = inlined_call_operand.vmem [shape: s32[3,2], index: 3, kind: output, shape index: {2}]
  %4 = xla_tuple %s1, %s2, %s3
  $region1: #{custom-call.11} parent=0
    #allocation0 [shape = 'u8[4096]{0}', space=vmem, size = 0x1000, scoped, tag = 'operand span for operand 0']
    #allocation1 [shape = 'u8[2048]{0}', space=vmem, size = 0x800, scoped, tag = 'packed  for operand 0']
    #allocation2 [shape = 'u8[4096]{0}', space=vmem, size = 0x1000, scoped, tag = 'operand span for operand 1']
    #allocation3 [shape = 'u8[2048]{0}', space=vmem, size = 0x800, scoped, tag = 'packed  for operand 1']
    #allocation4 [shape = 'u8[4096]{0}', space=vmem, size = 0x1000, scoped, tag = 'operand span for operand 2']
    #allocation5 [shape = 'u8[4096]{0}', space=vmem, size = 0x1000, scoped, tag = 'packed  for operand 2']
    #allocation6 [shape = 's32[2]{0}', space=sflag, size = 0x8, scoped, tag = 'scoped memory for custom-call.11']
    #allocation7 [shape = 'u8[4096]{0}', space=vmem, size = 0x1000, scoped, tag = 'operand span for operand 3']
    #allocation8 [shape = 'u8[4096]{0}', space=vmem, size = 0x1000, scoped, tag = 'packed  for operand 3']
    %5 = vsyncpa [#allocation6], 0
    %s6 = scalar_lea.sflag [#allocation6], 1
    %7 = vsyncpa %s6, 0
    loop: start=0, step=1, limit=5
    $region2: #{custom-call.11} parent=1 // loop_pre_header
      _
    $region3: #{custom-call.11} parent=1 // loop_header
      %s9 = sphi 0, %s13
      %p10 = scmp.ge.s32.totalorder %s9, 5
      %s21 = sphi 0, %s23
      %s24 = sphi 0, %s21
      %s25 = sphi 0, %s24
      %s41 = sphi 0, %s25
      %s49 = sphi 0, %s51
      %s52 = sphi 0, %s49
      %s53 = sphi 0, %s52
      %s69 = sphi 0, %s53
    $region4: #{custom-call.11} parent=1 // loop_header_branch
      %12 = sbr.rel (%p10) target = $region8
    $region5: #{custom-call.11} parent=1 // loop_body
      %s14 = ssub.s32 %s9, 1
      %s15 = ssub.s32 %s9, 2
      %s16 = sadd.s32 %s9, 1
      %s17 = sshrl.u32 %s9, 3
      %s18 = sshrl.u32 %s16, 3
      %s19 = ssub.s32 %s17, %s18
      %p20 = scmp.eq.s32.totalorder %s19, 0
      %s22 = sadd.s32 %s21, 1
      %s23 = scalar_select %p20, %s21, %s22
      %p26 = pneg %p20
      %p27 = scmp.eq.s32.totalorder %s9, 2
      %p28 = por %p26, %p27
      %p29 = scmp.ne.s32.totalorder %s21, %s24
      %p30 = scmp.eq.s32.totalorder %s9, 0
      %p31 = por %p29, %p30
      %p32 = scmp.ne.s32.totalorder %s21, %s24
      %p33 = scmp.eq.s32.totalorder %s14, 2
      %p34 = por %p32, %p33
      %p35 = scmp.ne.s32.totalorder %s24, %s25
      %p36 = scmp.eq.s32.totalorder %s14, 0
      %p37 = por %p35, %p36
      %p38 = scmp.ne.s32.totalorder %s24, %s25
      %p39 = scmp.eq.s32.totalorder %s15, 2
      %p40 = por %p38, %p39
      %p42 = scmp.ne.s32.totalorder %s25, %s41
      %p43 = scmp.eq.s32.totalorder %s15, 0
      %p44 = por %p42, %p43
      %s45 = sshrl.u32 %s9, 3
      %s46 = sshrl.u32 %s16, 3
      %s47 = ssub.s32 %s45, %s46
      %p48 = scmp.eq.s32.totalorder %s47, 0
      %s50 = sadd.s32 %s49, 1
      %s51 = scalar_select %p48, %s49, %s50
      %p54 = pneg %p48
      %p55 = scmp.eq.s32.totalorder %s9, 2
      %p56 = por %p54, %p55
      %p57 = scmp.ne.s32.totalorder %s49, %s52
      %p58 = scmp.eq.s32.totalorder %s9, 0
      %p59 = por %p57, %p58
      %p60 = scmp.ne.s32.totalorder %s49, %s52
      %p61 = scmp.eq.s32.totalorder %s14, 2
      %p62 = por %p60, %p61
      %p63 = scmp.ne.s32.totalorder %s52, %s53
      %p64 = scmp.eq.s32.totalorder %s14, 0
      %p65 = por %p63, %p64
      %p66 = scmp.ne.s32.totalorder %s52, %s53
      %p67 = scmp.eq.s32.totalorder %s15, 2
      %p68 = por %p66, %p67
      %p70 = scmp.ne.s32.totalorder %s53, %s69
      %p71 = scmp.eq.s32.totalorder %s15, 0
      %p72 = por %p70, %p71
      %p73 = scmp.le.s32.totalorder 1, %s9
      %p74 = scmp.lt.s32.totalorder %s9, 4
      %p75 = pnand %p73, %p74
      %p76 = pneg %p75
      // Predicated region
      $region9: #{custom-call.11} parent=5 // pred_check
        _
      $region10: #{custom-call.11} parent=5 // pred_check_branch
        %78 = sbr.rel (%p75) target = $region12
      $region11: #{custom-call.11} parent=5 // pred_region
        %s79 = ssub.s32 %s9, 1
      $region12: #{custom-call.11} parent=5 // pred_fallthru
        _
      %p80 = scmp.lt.s32.totalorder %s9, 3
      // Predicated region
      $region13: #{custom-call.11} parent=5 // pred_check
        %p81 = pneg %p80
      $region14: #{custom-call.11} parent=5 // pred_check_branch
        %83 = sbr.rel (%p81) target = $region16
      $region15: #{custom-call.11} parent=5 // pred_region
        %s84 = sand.u32 %s9, 1
        %s85 = sand.u32 %s9, 1
        %s86 = smul.addr %s85, 2
        %s87 = scalar_lea.vmem [#allocation1], %s86
        %s88 = smul.addr %s9, 2
        %s89 = scalar_lea.vmem %s0, %s88
        // Predicated region
        $region17: #{custom-call.11} parent=15 // pred_check
          _
        $region18: #{custom-call.11} parent=15 // pred_check_branch
          %91 = sbr.rel (0) target = $region20
        $region19: #{custom-call.11} parent=15 // pred_region
          // Predicated region
          $region21: #{custom-call.11} parent=19 // pred_check
            _
          $region22: #{custom-call.11} parent=19 // pred_check_branch
            %93 = sbr.rel target = $region24
          $region23: #{custom-call.11} parent=19 // pred_region
            // Predicated region
            $region36: #{custom-call.11} parent=23 // pred_check
              _
            $region37: #{custom-call.11} parent=23 // pred_check_branch
              %109 = sbr.rel (0) target = $region39
            $region38: #{custom-call.11} parent=23 // pred_region
              %s111 = ssub.s32 4, 1
              loop: start=0, step=1, limit=1
              $region40: #{custom-call.11} parent=38 // loop_pre_header
                _
              $region41: #{custom-call.11} parent=38 // loop_header
                %s113 = sphi 0, %s117
                %p114 = scmp.ge.s32.totalorder %s113, 1
                %s118 = sphi %s89, %s89
                %s119 = sphi %s87, %s87
              $region42: #{custom-call.11} parent=38 // loop_header_branch
                %116 = sbr.rel (%p114) target = $region46
              $region43: #{custom-call.11} parent=38 // loop_body
                %v120 = vld [vmem:[%s118] sm:%s111]
                %121 = vst [vmem:[%s119] sm:%s111] %v120
              $region44: #{custom-call.11} parent=38 // loop_footer
                %s117 = sadd.s32 1, %s113
              $region45: #{custom-call.11} parent=38 // loop_footer_branch
                %112 = sbr.rel target = $region41
              $region46: #{custom-call.11} parent=38 // loop_exit
                _
            $region39: #{custom-call.11} parent=23 // pred_fallthru
              _
          $region24: #{custom-call.11} parent=19 // pred_fallthru
            _
          // Predicated region
          $region25: #{custom-call.11} parent=19 // pred_check
            _
          $region26: #{custom-call.11} parent=19 // pred_check_branch
            %95 = sbr.rel (0) target = $region28
          $region27: #{custom-call.11} parent=19 // pred_region
            %s97 = ssub.s32 4, 1
            loop: start=0, step=1, limit=1
            $region29: #{custom-call.11} parent=27 // loop_pre_header
              _
            $region30: #{custom-call.11} parent=27 // loop_header
              %s99 = sphi 0, %s103
              %p100 = scmp.ge.s32.totalorder %s99, 1
              %s104 = sphi %s89, %s89
              %s105 = sphi %s87, %s87
            $region31: #{custom-call.11} parent=27 // loop_header_branch
              %102 = sbr.rel (%p100) target = $region35
            $region32: #{custom-call.11} parent=27 // loop_body
              %v106 = vld [vmem:[%s104] sm:%s97]
              %107 = vst [vmem:[%s105] sm:%s97] %v106
            $region33: #{custom-call.11} parent=27 // loop_footer
              %s103 = sadd.s32 1, %s99
            $region34: #{custom-call.11} parent=27 // loop_footer_branch
              %98 = sbr.rel target = $region30
            $region35: #{custom-call.11} parent=27 // loop_exit
              _
          $region28: #{custom-call.11} parent=19 // pred_fallthru
            _
        $region20: #{custom-call.11} parent=15 // pred_fallthru
          _
        %122 = vnop
      $region16: #{custom-call.11} parent=5 // pred_fallthru
        _
      %p123 = scmp.le.s32.totalorder 1, %s9
      %p124 = scmp.lt.s32.totalorder %s9, 4
      %p125 = pnand %p123, %p124
      %p126 = pneg %p125
      // Predicated region
      $region47: #{custom-call.11} parent=5 // pred_check
        _
      $region48: #{custom-call.11} parent=5 // pred_check_branch
        %128 = sbr.rel (%p125) target = $region50
      $region49: #{custom-call.11} parent=5 // pred_region
        #allocation9 [shape = 's32[2,128]{1,0}', space=vmem, size = 0x1000, scoped, tag = 'scratch for permutations']
        %s129 = ssub.s32 %s9, 1
        %s130 = sand.u32 %s14, 1
        %s131 = sand.u32 %s14, 1
        %s132 = smul.addr %s131, 2
        %s133 = scalar_lea.vmem [#allocation1], %s132
        %s134 = sand.u32 %s14, 1
        %s135 = sand.u32 %s14, 1
        %s136 = smul.addr %s135, 2
        %s137 = scalar_lea.vmem [#allocation1], %s136
        %s138 = sand.u32 %s14, 1
        %s139 = sand.u32 %s14, 1
        %s140 = smul.addr %s139, 2
        %s141 = scalar_lea.vmem [#allocation3], %s140
        %p142 = pneg %p37
        %p143 = pneg %p34
        %s144 = sand.u32 %s24, 1
        %s145 = scalar_lea.sflag [#allocation6], %s144
        %s146 = sand.u32 %s24, 1
        %s147 = smul.addr %s146, 4
        %s148 = scalar_lea.vmem [#allocation5], %s147
        %p149 = pneg %p65
        %p150 = pneg %p62
        %s151 = sand.u32 %s52, 1
        %s152 = sand.u32 %s52, 1
        %s153 = smul.addr %s152, 4
        %s154 = scalar_lea.vmem [#allocation8], %s153
        %s156 = sshll.u32 1, 2
        %s157 = ssub.s32 %s156, 1
        %v158 = vld [vmem:[%s137] sm:%s157]
        %159 = vst [vmem:[#allocation0] sm:%s157] %v158
        %s160 = sshrl.u32 %s14, 3
        %s161 = sshrl.u32 %s14, 3
        %v162 = vld [vmem:[#allocation0] sm:$0xff]
        %163 = vst [vmem:[#allocation2] sm:$0xff] %v162
        %s164 = sand.u32 %s14, 7
        %s165 = scalar_lea.vmem [#allocation4], %s164
        %s166 = sand.u32 %s14, 7
        %s167 = scalar_lea.vmem [#allocation7], %s166
        %168 = vst [vmem:[%s165] sm:$0x1] 0
        %v169 = vlaneseq
        %v170 = vshrl.u32 %v169, 7
        %v171 = vmov %v170
        %173 = vst [vmem:[#allocation9] sm:$0xff] %v171
        loop: start=0, step=1, limit=2
        $region52: #{custom-call.11} parent=49 // loop_pre_header
          _
        $region53: #{custom-call.11} parent=49 // loop_header
          %s175 = sphi 0, %s179
          %p176 = scmp.ge.s32.totalorder %s175, 2
        $region54: #{custom-call.11} parent=49 // loop_header_branch
          %178 = sbr.rel (%p176) target = $region58
        $region55: #{custom-call.11} parent=49 // loop_body
          %v180 = vstv %s175
          %v181 = vlaneseq
          %v182 = vshrl.u32 %v181, 7
          %v183 = vmov %v182
          %v184 = vld [vmem:[#allocation2] sm:$0xff]
          %v185 = vand.u32 2147483647, %v184
          %v187 = vstv %s175
          %vm188 = vcmp.ge.s32.totalorder %v183, %v187
          %vm189 = vcmp.lt.s32.totalorder %v183, 2
          %vm190 = vmand %vm188, %vm189
          %vm191 = vcmp.lt.f32.partialorder -inf, %v185
          %vm192 = vmand %vm190, %vm191
          %v193 = vsel %vm192, %v183, %v180
          %v194 = vsel %vm192, %v185, -inf
          %v195 = vrot.slane %v194, 1
          %v196 = vrot.slane %v193, 1
          %vm197 = vcmp.ge.f32.partialorder %v195, %v194
          %v198 = vsel %vm197, %v195, %v194
          %v199 = vsel %vm197, %v196, %v193
          %v200 = vrot.slane %v195, 1
          %v201 = vrot.slane %v196, 1
          %vm202 = vcmp.ge.f32.partialorder %v200, %v198
          %v203 = vsel %vm202, %v200, %v198
          %v204 = vsel %vm202, %v201, %v199
          %v205 = vrot.slane %v200, 1
          %v206 = vrot.slane %v201, 1
          %vm207 = vcmp.ge.f32.partialorder %v205, %v203
          %v208 = vsel %vm207, %v205, %v203
          %v209 = vsel %vm207, %v206, %v204
          %v210 = vrot.slane %v205, 1
          %v211 = vrot.slane %v206, 1
          %vm212 = vcmp.ge.f32.partialorder %v210, %v208
          %v213 = vsel %vm212, %v210, %v208
          %v214 = vsel %vm212, %v211, %v209
          %v215 = vrot.slane %v210, 1
          %v216 = vrot.slane %v211, 1
          %vm217 = vcmp.ge.f32.partialorder %v215, %v213
          %v218 = vsel %vm217, %v215, %v213
          %v219 = vsel %vm217, %v216, %v214
          %v220 = vrot.slane %v215, 1
          %v221 = vrot.slane %v216, 1
          %vm222 = vcmp.ge.f32.partialorder %v220, %v218
          %v223 = vsel %vm222, %v220, %v218
          %v224 = vsel %vm222, %v221, %v219
          %v225 = vrot.slane %v220, 1
          %v226 = vrot.slane %v221, 1
          %vm227 = vcmp.ge.f32.partialorder %v225, %v223
          %v228 = vsel %vm227, %v225, %v223
          %v229 = vsel %vm227, %v226, %v224
          %s230 = ssub.s32 128, %s175
          %231 = vrot.lane.b32.xlu0 %v229, %s230
          %v232 = vpop.permute.xlu0 %231
          %s233 = vtos %v232
          %v234 = vstv %s175
          %v235 = vlaneseq
          %v236 = vand.u32 %v235, 127
          %vm237 = vcmp.eq.s32.totalorder %v236, %v234
          %v238 = vstv %s233
          %v239 = vld [vmem:[%s165] ss:$0 sm:$0xff]
          %v240 = vsel %vm237, %v238, %v239
          %241 = vst [vmem:[%s165] sm:$0x1] %v240
          %s242 = scalar_lea.vmem [#allocation2], %s175
          %s243 = scalar_lea.vmem [#allocation2], %s233
          %v244 = vld [vmem:[%s242] ss:$0 sm:$0xff]
          %v245 = vld [vmem:[%s243] ss:$0 sm:$0xff]
          %246 = vst [vmem:[%s243] sm:$0x1] %v244
          %247 = vst [vmem:[%s242] sm:$0x1] %v245
          %s248 = scalar_lea.vmem [#allocation9], %s175
          %s249 = scalar_lea.vmem [#allocation9], %s233
          %v250 = vld [vmem:[%s248] ss:$0 sm:$0xff]
          %v251 = vld [vmem:[%s249] ss:$0 sm:$0xff]
          %252 = vst [vmem:[%s249] sm:$0x1] %v250
          %253 = vst [vmem:[%s248] sm:$0x1] %v251
          %vm254 = vcmp.ne.f32.partialorder %v245, 0.0
          %vm255 = vmand %vm237, %vm254
          %v256 = vsel %vm255, %v245, 1.0
          %v257 = vlaneseq
          %v258 = vand.u32 %v257, 127
          %v259 = vstv %s175
          %vm260 = vcmp.gt.s32.totalorder %v258, %v259
          %v261 = vsel %vm260, %v245, 0.0
          %v262 = vlaneseq
          %v263 = vshrl.u32 %v262, 7
          %v264 = vmov %v263
          %v265 = vld [vmem:[#allocation2] sm:$0xff]
          %v267 = vstv %s175
          %vm268 = vcmp.gt.s32.totalorder %v264, %v267
          %v269 = vsel %vm268, %v256, 1.0
          %v270 = vrcp.pop %v269
          %v271 = vmul.f32 %v265, %v270
          %vm272 = vmand %vm268, %vm237
          %v273 = vsel %vm272, %v271, 0.0
          %274 = vadd.xlane.f32.xlu0 %v273
          %v275 = vpop.xlane.xlu0 %274
          %v276 = vmul.f32 %v275, %v261
          %v277 = vsub.f32 %v271, %v276
          %278 = vst [vmem:[#allocation2] sm:$0xff] %v277
        $region56: #{custom-call.11} parent=49 // loop_footer
          %s179 = sadd.s32 1, %s175
        $region57: #{custom-call.11} parent=49 // loop_footer_branch
          %174 = sbr.rel target = $region53
        $region58: #{custom-call.11} parent=49 // loop_exit
          _
        %v279 = vld [vmem:[#allocation9] sm:$0xff]
        %s280 = scalar_lea.vmem [#allocation9], 8
        %s281 = scalar_lea.vmem [#allocation9], 16
        %s282 = scalar_lea.vmem [#allocation9], 24
        %s283 = scalar_lea.vmem [#allocation9], 32
        %s284 = scalar_lea.vmem [#allocation9], 40
        %s285 = scalar_lea.vmem [#allocation9], 48
        %s286 = scalar_lea.vmem [#allocation9], 56
        %s287 = scalar_lea.vmem [#allocation9], 64
        %s288 = scalar_lea.vmem [#allocation9], 72
        %s289 = scalar_lea.vmem [#allocation9], 80
        %s290 = scalar_lea.vmem [#allocation9], 88
        %s291 = scalar_lea.vmem [#allocation9], 96
        %s292 = scalar_lea.vmem [#allocation9], 104
        %s293 = scalar_lea.vmem [#allocation9], 112
        %s294 = scalar_lea.vmem [#allocation9], 120
        %295 = vxpose.xlu0.b32.start [1/16] %v279, 128
        %296 = vxpose.xlu0.b32.cont [2/16] 0, 128
        %297 = vxpose.xlu0.b32.cont [3/16] 0, 128
        %298 = vxpose.xlu0.b32.cont [4/16] 0, 128
        %299 = vxpose.xlu0.b32.cont [5/16] 0, 128
        %300 = vxpose.xlu0.b32.cont [6/16] 0, 128
        %301 = vxpose.xlu0.b32.cont [7/16] 0, 128
        %302 = vxpose.xlu0.b32.cont [8/16] 0, 128
        %303 = vxpose.xlu0.b32.cont [9/16] 0, 128
        %304 = vxpose.xlu0.b32.cont [10/16] 0, 128
        %305 = vxpose.xlu0.b32.cont [11/16] 0, 128
        %306 = vxpose.xlu0.b32.cont [12/16] 0, 128
        %307 = vxpose.xlu0.b32.cont [13/16] 0, 128
        %308 = vxpose.xlu0.b32.cont [14/16] 0, 128
        %309 = vxpose.xlu0.b32.cont [15/16] 0, 128
        %310 = vxpose.xlu0.b32.end [16/16] 0, 128
        %v311 = vpop.trf.xlu0
        %v312 = vpop.trf.xlu0
        %v313 = vpop.trf.xlu0
        %v314 = vpop.trf.xlu0
        %v315 = vpop.trf.xlu0
        %v316 = vpop.trf.xlu0
        %v317 = vpop.trf.xlu0
        %v318 = vpop.trf.xlu0
        %v319 = vpop.trf.xlu0
        %v320 = vpop.trf.xlu0
        %v321 = vpop.trf.xlu0
        %v322 = vpop.trf.xlu0
        %v323 = vpop.trf.xlu0
        %v324 = vpop.trf.xlu0
        %v325 = vpop.trf.xlu0
        %v326 = vpop.trf.xlu0
        %327 = vst [vmem:[%s167] sm:$0x1] %v311
        %s329 = sshll.u32 1, 2
        %s330 = ssub.s32 %s329, 1
        %v332 = vld [vmem:[#allocation2] sm:%s330]
        %s333 = sshll.u32 1, 2
        %s334 = ssub.s32 %s333, 1
        %335 = vst [vmem:[%s141] sm:%s334] %v332
        %s337 = sshll.u32 1, 4
        %s338 = ssub.s32 %s337, 1
        %v340 = vld [vmem:[#allocation4] sm:%s338]
        %s341 = sshll.u32 1, 4
        %s342 = ssub.s32 %s341, 1
        %343 = vst [vmem:[%s148] sm:%s342] %v340
        %s345 = sshll.u32 1, 4
        %s346 = ssub.s32 %s345, 1
        %v348 = vld [vmem:[#allocation7] sm:%s346]
        %s349 = sshll.u32 1, 4
        %s350 = ssub.s32 %s349, 1
        %351 = vst [vmem:[%s154] sm:%s350] %v348
        %s352 = sand.u32 %s14, 1
        %s353 = sand.u32 %s14, 1
        %s354 = smul.addr %s353, 2
        %s355 = scalar_lea.vmem [#allocation3], %s354
        %s356 = sand.u32 %s24, 1
        %s357 = scalar_lea.sflag [#allocation6], %s356
        %s358 = sand.u32 %s24, 1
        %s359 = smul.addr %s358, 4
        %s360 = scalar_lea.vmem [#allocation5], %s359
        %s361 = sand.u32 %s52, 1
        %s362 = sand.u32 %s52, 1
        %s363 = smul.addr %s362, 4
        %s364 = scalar_lea.vmem [#allocation8], %s363
        %s365 = smul.addr %s14, 2
        %s366 = scalar_lea.vmem %s1, %s365
        // Predicated region
        $region59: #{custom-call.11} parent=49 // pred_check
          _
        $region60: #{custom-call.11} parent=49 // pred_check_branch
          %368 = sbr.rel (0) target = $region62
        $region61: #{custom-call.11} parent=49 // pred_region
          // Predicated region
          $region63: #{custom-call.11} parent=61 // pred_check
            _
          $region64: #{custom-call.11} parent=61 // pred_check_branch
            %370 = sbr.rel target = $region66
          $region65: #{custom-call.11} parent=61 // pred_region
            // Predicated region
            $region78: #{custom-call.11} parent=65 // pred_check
              _
            $region79: #{custom-call.11} parent=65 // pred_check_branch
              %386 = sbr.rel (0) target = $region81
            $region80: #{custom-call.11} parent=65 // pred_region
              %s388 = ssub.s32 4, 1
              loop: start=0, step=1, limit=1
              $region82: #{custom-call.11} parent=80 // loop_pre_header
                _
              $region83: #{custom-call.11} parent=80 // loop_header
                %s390 = sphi 0, %s394
                %p391 = scmp.ge.s32.totalorder %s390, 1
                %s395 = sphi %s355, %s355
                %s396 = sphi %s366, %s366
              $region84: #{custom-call.11} parent=80 // loop_header_branch
                %393 = sbr.rel (%p391) target = $region88
              $region85: #{custom-call.11} parent=80 // loop_body
                %v397 = vld [vmem:[%s395] sm:%s388]
                %398 = vst [vmem:[%s396] sm:%s388] %v397
              $region86: #{custom-call.11} parent=80 // loop_footer
                %s394 = sadd.s32 1, %s390
              $region87: #{custom-call.11} parent=80 // loop_footer_branch
                %389 = sbr.rel target = $region83
              $region88: #{custom-call.11} parent=80 // loop_exit
                _
            $region81: #{custom-call.11} parent=65 // pred_fallthru
              _
          $region66: #{custom-call.11} parent=61 // pred_fallthru
            _
          // Predicated region
          $region67: #{custom-call.11} parent=61 // pred_check
            _
          $region68: #{custom-call.11} parent=61 // pred_check_branch
            %372 = sbr.rel (0) target = $region70
          $region69: #{custom-call.11} parent=61 // pred_region
            %s374 = ssub.s32 4, 1
            loop: start=0, step=1, limit=1
            $region71: #{custom-call.11} parent=69 // loop_pre_header
              _
            $region72: #{custom-call.11} parent=69 // loop_header
              %s376 = sphi 0, %s380
              %p377 = scmp.ge.s32.totalorder %s376, 1
              %s381 = sphi %s355, %s355
              %s382 = sphi %s366, %s366
            $region73: #{custom-call.11} parent=69 // loop_header_branch
              %379 = sbr.rel (%p377) target = $region77
            $region74: #{custom-call.11} parent=69 // loop_body
              %v383 = vld [vmem:[%s381] sm:%s374]
              %384 = vst [vmem:[%s382] sm:%s374] %v383
            $region75: #{custom-call.11} parent=69 // loop_footer
              %s380 = sadd.s32 1, %s376
            $region76: #{custom-call.11} parent=69 // loop_footer_branch
              %375 = sbr.rel target = $region72
            $region77: #{custom-call.11} parent=69 // loop_exit
              _
          $region70: #{custom-call.11} parent=61 // pred_fallthru
            _
        $region62: #{custom-call.11} parent=49 // pred_fallthru
          _
        %399 = vnop
        // Predicated region
        $region89: #{custom-call.11} parent=49 // pred_check
          %p400 = pneg %p34
        $region90: #{custom-call.11} parent=49 // pred_check_branch
          %402 = sbr.rel (%p400) target = $region92
        $region91: #{custom-call.11} parent=49 // pred_region
          %s403 = sshrl.u32 %s14, 3
          %s405 = ssub.s32 64, 64
          %406 = vsyncadd %s357, %s405
          %s407 = smul.addr %s403, 64
          %s408 = scalar_lea.hbm %s2, %s407
          %s410 = sshll.u32 %s360, 4
          %s411 = int_to_ptr.vmem [resolvable:$true] %s410
          %413 = dma.vmem_to_hbm [thread:$0]  %s411, 64, %s408, %s357
        $region92: #{custom-call.11} parent=49 // pred_fallthru
          _
        // Predicated region
        $region93: #{custom-call.11} parent=49 // pred_check
          %p414 = pneg %p62
        $region94: #{custom-call.11} parent=49 // pred_check_branch
          %416 = sbr.rel (%p414) target = $region96
        $region95: #{custom-call.11} parent=49 // pred_region
          %s417 = sshrl.u32 %s14, 3
          %s418 = smul.addr %s417, 4
          %s419 = scalar_lea.vmem %s3, %s418
          // Predicated region
          $region97: #{custom-call.11} parent=95 // pred_check
            _
          $region98: #{custom-call.11} parent=95 // pred_check_branch
            %421 = sbr.rel (0) target = $region100
          $region99: #{custom-call.11} parent=95 // pred_region
            // Predicated region
            $region101: #{custom-call.11} parent=99 // pred_check
              _
            $region102: #{custom-call.11} parent=99 // pred_check_branch
              %423 = sbr.rel target = $region104
            $region103: #{custom-call.11} parent=99 // pred_region
              // Predicated region
              $region116: #{custom-call.11} parent=103 // pred_check
                _
              $region117: #{custom-call.11} parent=103 // pred_check_branch
                %439 = sbr.rel (0) target = $region119
              $region118: #{custom-call.11} parent=103 // pred_region
                %s441 = ssub.s32 16, 1
                loop: start=0, step=1, limit=1
                $region120: #{custom-call.11} parent=118 // loop_pre_header
                  _
                $region121: #{custom-call.11} parent=118 // loop_header
                  %s443 = sphi 0, %s447
                  %p444 = scmp.ge.s32.totalorder %s443, 1
                  %s448 = sphi %s364, %s364
                  %s449 = sphi %s419, %s419
                $region122: #{custom-call.11} parent=118 // loop_header_branch
                  %446 = sbr.rel (%p444) target = $region126
                $region123: #{custom-call.11} parent=118 // loop_body
                  %v450 = vld [vmem:[%s448] sm:%s441]
                  %451 = vst [vmem:[%s449] sm:%s441] %v450
                $region124: #{custom-call.11} parent=118 // loop_footer
                  %s447 = sadd.s32 1, %s443
                $region125: #{custom-call.11} parent=118 // loop_footer_branch
                  %442 = sbr.rel target = $region121
                $region126: #{custom-call.11} parent=118 // loop_exit
                  _
              $region119: #{custom-call.11} parent=103 // pred_fallthru
                _
            $region104: #{custom-call.11} parent=99 // pred_fallthru
              _
            // Predicated region
            $region105: #{custom-call.11} parent=99 // pred_check
              _
            $region106: #{custom-call.11} parent=99 // pred_check_branch
              %425 = sbr.rel (0) target = $region108
            $region107: #{custom-call.11} parent=99 // pred_region
              %s427 = ssub.s32 16, 1
              loop: start=0, step=1, limit=1
              $region109: #{custom-call.11} parent=107 // loop_pre_header
                _
              $region110: #{custom-call.11} parent=107 // loop_header
                %s429 = sphi 0, %s433
                %p430 = scmp.ge.s32.totalorder %s429, 1
                %s434 = sphi %s364, %s364
                %s435 = sphi %s419, %s419
              $region111: #{custom-call.11} parent=107 // loop_header_branch
                %432 = sbr.rel (%p430) target = $region115
              $region112: #{custom-call.11} parent=107 // loop_body
                %v436 = vld [vmem:[%s434] sm:%s427]
                %437 = vst [vmem:[%s435] sm:%s427] %v436
              $region113: #{custom-call.11} parent=107 // loop_footer
                %s433 = sadd.s32 1, %s429
              $region114: #{custom-call.11} parent=107 // loop_footer_branch
                %428 = sbr.rel target = $region110
              $region115: #{custom-call.11} parent=107 // loop_exit
                _
            $region108: #{custom-call.11} parent=99 // pred_fallthru
              _
          $region100: #{custom-call.11} parent=95 // pred_fallthru
            _
          %452 = vnop
        $region96: #{custom-call.11} parent=49 // pred_fallthru
          _
      $region50: #{custom-call.11} parent=5 // pred_fallthru
        _
      %p453 = scmp.le.s32.totalorder 2, %s9
      // Predicated region
      $region127: #{custom-call.11} parent=5 // pred_check
        %p454 = pneg %p453
      $region128: #{custom-call.11} parent=5 // pred_check_branch
        %456 = sbr.rel (%p454) target = $region130
      $region129: #{custom-call.11} parent=5 // pred_region
        %s457 = ssub.s32 %s9, 2
        %s458 = sand.u32 %s15, 1
        %s459 = sand.u32 %s15, 1
        %s460 = smul.addr %s459, 2
        %s461 = scalar_lea.vmem [#allocation3], %s460
        // Predicated region
        $region131: #{custom-call.11} parent=129 // pred_check
          %p462 = pneg %p40
        $region132: #{custom-call.11} parent=129 // pred_check_branch
          %464 = sbr.rel (%p462) target = $region134
        $region133: #{custom-call.11} parent=129 // pred_region
          %s465 = sand.u32 %s25, 1
          %s466 = scalar_lea.sflag [#allocation6], %s465
          %s467 = sand.u32 %s25, 1
          %s468 = smul.addr %s467, 4
          %s469 = scalar_lea.vmem [#allocation5], %s468
          %470 = dma.done %s466, 64
        $region134: #{custom-call.11} parent=129 // pred_fallthru
          _
        // Predicated region
        $region135: #{custom-call.11} parent=129 // pred_check
          %p471 = pneg %p68
        $region136: #{custom-call.11} parent=129 // pred_check_branch
          %473 = sbr.rel (%p471) target = $region138
        $region137: #{custom-call.11} parent=129 // pred_region
          %s474 = sand.u32 %s53, 1
          %s475 = sand.u32 %s53, 1
          %s476 = smul.addr %s475, 4
          %s477 = scalar_lea.vmem [#allocation8], %s476
        $region138: #{custom-call.11} parent=129 // pred_fallthru
          _
      $region130: #{custom-call.11} parent=5 // pred_fallthru
        _
    $region6: #{custom-call.11} parent=1 // loop_footer
      %s13 = sadd.s32 1, %s9
    $region7: #{custom-call.11} parent=1 // loop_footer_branch
      %8 = sbr.rel target = $region3
    $region8: #{custom-call.11} parent=1 // loop_exit
      _
    %478 = vsyncpa [#allocation6], 1
    %s479 = scalar_lea.sflag [#allocation6], 1
    %480 = vsyncpa %s479, 1

// kernel: custom-call.12
$region0: #{custom-call.12}
  %s0 = inlined_call_operand.vmem [shape: f32[3,1,2,2], index: 0, kind: input, shape index: {}]
  %s1 = inlined_call_operand.vmem [shape: f32[3,1,2,2], index: 1, kind: output, shape index: {}]
  $region1: #{custom-call.12} parent=0
    #allocation0 [shape = 'u8[4096]{0}', space=vmem, size = 0x1000, scoped, tag = 'operand span for operand 0']
    #allocation1 [shape = 'u8[2048]{0}', space=vmem, size = 0x800, scoped, tag = 'packed  for operand 0']
    #allocation2 [shape = 'u8[4096]{0}', space=vmem, size = 0x1000, scoped, tag = 'operand span for operand 1']
    #allocation3 [shape = 'u8[2048]{0}', space=vmem, size = 0x800, scoped, tag = 'packed  for operand 1']
    loop: start=0, step=1, limit=5
    $region2: #{custom-call.12} parent=1 // loop_pre_header
      _
    $region3: #{custom-call.12} parent=1 // loop_header
      %s3 = sphi 0, %s7
      %p4 = scmp.ge.s32.totalorder %s3, 5
      %s10 = sphi 0, %s36
      %s11 = sphi 0, %s32
      %s12 = sphi 0, %s28
      %s13 = sphi 0, %s24
      %s14 = sphi 0, %s10
      %s15 = sphi 0, %s11
      %s16 = sphi 0, %s12
      %s17 = sphi 0, %s13
      %s18 = sphi 0, %s14
      %s19 = sphi 0, %s15
      %s20 = sphi 0, %s16
      %s21 = sphi 0, %s17
    $region4: #{custom-call.12} parent=1 // loop_header_branch
      %6 = sbr.rel (%p4) target = $region8
    $region5: #{custom-call.12} parent=1 // loop_body
      %s8 = ssub.s32 %s3, 1
      %s9 = ssub.s32 %s3, 2
      %s22 = sadd.s32 1, %s13
      %p23 = scmp.ge.s32.totalorder %s22, 1
      %s24 = scalar_select %p23, 0, %s22
      %s25 = sadd.s32 1, %s12
      %s26 = scalar_select %p23, %s25, %s12
      %p27 = scmp.ge.s32.totalorder %s26, 1
      %s28 = scalar_select %p27, 0, %s26
      %s29 = sadd.s32 1, %s11
      %s30 = scalar_select %p27, %s29, %s11
      %p31 = scmp.ge.s32.totalorder %s30, 1
      %s32 = scalar_select %p31, 0, %s30
      %s33 = sadd.s32 1, %s10
      %s34 = scalar_select %p31, %s33, %s10
      %p35 = scmp.ge.s32.totalorder %s34, 3
      %s36 = scalar_select %p35, 0, %s34
      %p37 = scmp.le.s32.totalorder 1, %s3
      %p38 = scmp.lt.s32.totalorder %s3, 4
      %p39 = pnand %p37, %p38
      %p40 = pneg %p39
      // Predicated region
      $region9: #{custom-call.12} parent=5 // pred_check
        _
      $region10: #{custom-call.12} parent=5 // pred_check_branch
        %42 = sbr.rel (%p39) target = $region12
      $region11: #{custom-call.12} parent=5 // pred_region
        %s43 = ssub.s32 %s3, 1
      $region12: #{custom-call.12} parent=5 // pred_fallthru
        _
      %p44 = scmp.lt.s32.totalorder %s3, 3
      // Predicated region
      $region13: #{custom-call.12} parent=5 // pred_check
        %p45 = pneg %p44
      $region14: #{custom-call.12} parent=5 // pred_check_branch
        %47 = sbr.rel (%p45) target = $region16
      $region15: #{custom-call.12} parent=5 // pred_region
        %s48 = sand.u32 %s3, 1
        %s49 = sand.u32 %s3, 1
        %s50 = smul.addr %s49, 2
        %s51 = scalar_lea.vmem [#allocation1], %s50
        %s52 = sadd.s32 %s13, %s12
        %s53 = sadd.s32 %s52, %s11
        %s54 = sadd.s32 %s53, %s10
        %s55 = smul.addr %s54, 2
        %s56 = scalar_lea.vmem %s0, %s55
        // Predicated region
        $region17: #{custom-call.12} parent=15 // pred_check
          _
        $region18: #{custom-call.12} parent=15 // pred_check_branch
          %58 = sbr.rel (0) target = $region20
        $region19: #{custom-call.12} parent=15 // pred_region
          // Predicated region
          $region21: #{custom-call.12} parent=19 // pred_check
            _
          $region22: #{custom-call.12} parent=19 // pred_check_branch
            %60 = sbr.rel target = $region24
          $region23: #{custom-call.12} parent=19 // pred_region
            // Predicated region
            $region36: #{custom-call.12} parent=23 // pred_check
              _
            $region37: #{custom-call.12} parent=23 // pred_check_branch
              %76 = sbr.rel (0) target = $region39
            $region38: #{custom-call.12} parent=23 // pred_region
              %s78 = ssub.s32 4, 1
              loop: start=0, step=1, limit=1
              $region40: #{custom-call.12} parent=38 // loop_pre_header
                _
              $region41: #{custom-call.12} parent=38 // loop_header
                %s80 = sphi 0, %s84
                %p81 = scmp.ge.s32.totalorder %s80, 1
                %s85 = sphi %s56, %s56
                %s86 = sphi %s51, %s51
              $region42: #{custom-call.12} parent=38 // loop_header_branch
                %83 = sbr.rel (%p81) target = $region46
              $region43: #{custom-call.12} parent=38 // loop_body
                %v87 = vld [vmem:[%s85] sm:%s78]
                %88 = vst [vmem:[%s86] sm:%s78] %v87
              $region44: #{custom-call.12} parent=38 // loop_footer
                %s84 = sadd.s32 1, %s80
              $region45: #{custom-call.12} parent=38 // loop_footer_branch
                %79 = sbr.rel target = $region41
              $region46: #{custom-call.12} parent=38 // loop_exit
                _
            $region39: #{custom-call.12} parent=23 // pred_fallthru
              _
          $region24: #{custom-call.12} parent=19 // pred_fallthru
            _
          // Predicated region
          $region25: #{custom-call.12} parent=19 // pred_check
            _
          $region26: #{custom-call.12} parent=19 // pred_check_branch
            %62 = sbr.rel (0) target = $region28
          $region27: #{custom-call.12} parent=19 // pred_region
            %s64 = ssub.s32 4, 1
            loop: start=0, step=1, limit=1
            $region29: #{custom-call.12} parent=27 // loop_pre_header
              _
            $region30: #{custom-call.12} parent=27 // loop_header
              %s66 = sphi 0, %s70
              %p67 = scmp.ge.s32.totalorder %s66, 1
              %s71 = sphi %s56, %s56
              %s72 = sphi %s51, %s51
            $region31: #{custom-call.12} parent=27 // loop_header_branch
              %69 = sbr.rel (%p67) target = $region35
            $region32: #{custom-call.12} parent=27 // loop_body
              %v73 = vld [vmem:[%s71] sm:%s64]
              %74 = vst [vmem:[%s72] sm:%s64] %v73
            $region33: #{custom-call.12} parent=27 // loop_footer
              %s70 = sadd.s32 1, %s66
            $region34: #{custom-call.12} parent=27 // loop_footer_branch
              %65 = sbr.rel target = $region30
            $region35: #{custom-call.12} parent=27 // loop_exit
              _
          $region28: #{custom-call.12} parent=19 // pred_fallthru
            _
        $region20: #{custom-call.12} parent=15 // pred_fallthru
          _
        %89 = vnop
      $region16: #{custom-call.12} parent=5 // pred_fallthru
        _
      %p90 = scmp.le.s32.totalorder 1, %s3
      %p91 = scmp.lt.s32.totalorder %s3, 4
      %p92 = pnand %p90, %p91
      %p93 = pneg %p92
      // Predicated region
      $region47: #{custom-call.12} parent=5 // pred_check
        _
      $region48: #{custom-call.12} parent=5 // pred_check_branch
        %95 = sbr.rel (%p92) target = $region50
      $region49: #{custom-call.12} parent=5 // pred_region
        #allocation4 [shape = 'f32[2,2]{1,0}', space=vmem, size = 0x1000, scoped, tag = 'rescaled input a']
        %s96 = ssub.s32 %s3, 1
        %s97 = sand.u32 %s8, 1
        %s98 = sand.u32 %s8, 1
        %s99 = smul.addr %s98, 2
        %s100 = scalar_lea.vmem [#allocation1], %s99
        %s101 = sand.u32 %s8, 1
        %s102 = sand.u32 %s8, 1
        %s103 = smul.addr %s102, 2
        %s104 = scalar_lea.vmem [#allocation1], %s103
        %s105 = sand.u32 %s8, 1
        %s106 = sand.u32 %s8, 1
        %s107 = smul.addr %s106, 2
        %s108 = scalar_lea.vmem [#allocation3], %s107
        %s110 = sshll.u32 1, 2
        %s111 = ssub.s32 %s110, 1
        %v112 = vld [vmem:[%s104] sm:%s111]
        %113 = vst [vmem:[#allocation0] sm:%s111] %v112
        %v114 = vlaneseq
        %v115 = vand.u32 %v114, 127
        %vm116 = vcmp.lt.s32.totalorder %v115, 2
        %v117 = vlaneseq
        %v118 = vshrl.u32 %v117, 7
        %vm120 = vcmp.eq.s32.totalorder %v118, %v115
        %v121 = vld [vmem:[#allocation0] sm:$0xff]
        %v122 = vsel %vm120, %v121, 0.0
        %123 = vadd.xlane.f32.xlu0 %v122
        %v124 = vpop.xlane.xlu0 %123
        %vm125 = vcmp.le.s32.totalorder %v118, %v115
        %vm126 = vmand %vm125, %vm116
        %v127 = vsel %vm126, %v121, 0.0
        %v128 = vrcp.pop %v124
        %v129 = vmul.f32 %v127, %v128
        %130 = vst [vmem:[#allocation4] sm:$0xff] %v129
        %v131 = vlaneseq
        %v132 = vand.u32 %v131, 127
        %v133 = vlaneseq
        %v134 = vshrl.u32 %v133, 7
        %vm136 = vcmp.eq.s32.totalorder %v132, %v134
        %v137 = vlaneseq
        %v138 = vand.u32 %v137, 127
        %vm139 = vcmp.eq.s32.totalorder %v138, 1
        %v140 = vsel %vm139, 1.0, -1.0
        %v141 = vsel %vm136, %v140, 0.0
        %v142 = vld [vmem:[#allocation4] ss:$0 sm:$0xff]
        %v143 = vxor.u32 %v142, 2147483648
        %v144 = vlaneseq
        %v145 = vand.u32 %v144, 127
        %vm146 = vcmp.eq.s32.totalorder %v145, 0
        %v147 = vmul.f32 %v143, %v141
        %148 = vadd.xlane.f32.xlu0 %v147
        %v149 = vpop.xlane.xlu0 %148
        %v150 = vsel %vm146, %v149, %v141
        %v151 = vrcp.pop %v124
        %v152 = vmul.f32 %v150, %v151
        %vm153 = vweird.f32 %v124
        %v154 = vsel %vm153, %v150, %v152
        %155 = vst [vmem:[#allocation2] sm:$0xff] %v154
        %s157 = sshll.u32 1, 2
        %s158 = ssub.s32 %s157, 1
        %v160 = vld [vmem:[#allocation2] sm:%s158]
        %s161 = sshll.u32 1, 2
        %s162 = ssub.s32 %s161, 1
        %163 = vst [vmem:[%s108] sm:%s162] %v160
        %s164 = sand.u32 %s8, 1
        %s165 = sand.u32 %s8, 1
        %s166 = smul.addr %s165, 2
        %s167 = scalar_lea.vmem [#allocation3], %s166
        %s168 = sadd.s32 %s17, %s16
        %s169 = sadd.s32 %s168, %s15
        %s170 = sadd.s32 %s169, %s14
        %s171 = smul.addr %s170, 2
        %s172 = scalar_lea.vmem %s1, %s171
        // Predicated region
        $region51: #{custom-call.12} parent=49 // pred_check
          _
        $region52: #{custom-call.12} parent=49 // pred_check_branch
          %174 = sbr.rel (0) target = $region54
        $region53: #{custom-call.12} parent=49 // pred_region
          // Predicated region
          $region55: #{custom-call.12} parent=53 // pred_check
            _
          $region56: #{custom-call.12} parent=53 // pred_check_branch
            %176 = sbr.rel target = $region58
          $region57: #{custom-call.12} parent=53 // pred_region
            // Predicated region
            $region70: #{custom-call.12} parent=57 // pred_check
              _
            $region71: #{custom-call.12} parent=57 // pred_check_branch
              %192 = sbr.rel (0) target = $region73
            $region72: #{custom-call.12} parent=57 // pred_region
              %s194 = ssub.s32 4, 1
              loop: start=0, step=1, limit=1
              $region74: #{custom-call.12} parent=72 // loop_pre_header
                _
              $region75: #{custom-call.12} parent=72 // loop_header
                %s196 = sphi 0, %s200
                %p197 = scmp.ge.s32.totalorder %s196, 1
                %s201 = sphi %s167, %s167
                %s202 = sphi %s172, %s172
              $region76: #{custom-call.12} parent=72 // loop_header_branch
                %199 = sbr.rel (%p197) target = $region80
              $region77: #{custom-call.12} parent=72 // loop_body
                %v203 = vld [vmem:[%s201] sm:%s194]
                %204 = vst [vmem:[%s202] sm:%s194] %v203
              $region78: #{custom-call.12} parent=72 // loop_footer
                %s200 = sadd.s32 1, %s196
              $region79: #{custom-call.12} parent=72 // loop_footer_branch
                %195 = sbr.rel target = $region75
              $region80: #{custom-call.12} parent=72 // loop_exit
                _
            $region73: #{custom-call.12} parent=57 // pred_fallthru
              _
          $region58: #{custom-call.12} parent=53 // pred_fallthru
            _
          // Predicated region
          $region59: #{custom-call.12} parent=53 // pred_check
            _
          $region60: #{custom-call.12} parent=53 // pred_check_branch
            %178 = sbr.rel (0) target = $region62
          $region61: #{custom-call.12} parent=53 // pred_region
            %s180 = ssub.s32 4, 1
            loop: start=0, step=1, limit=1
            $region63: #{custom-call.12} parent=61 // loop_pre_header
              _
            $region64: #{custom-call.12} parent=61 // loop_header
              %s182 = sphi 0, %s186
              %p183 = scmp.ge.s32.totalorder %s182, 1
              %s187 = sphi %s167, %s167
              %s188 = sphi %s172, %s172
            $region65: #{custom-call.12} parent=61 // loop_header_branch
              %185 = sbr.rel (%p183) target = $region69
            $region66: #{custom-call.12} parent=61 // loop_body
              %v189 = vld [vmem:[%s187] sm:%s180]
              %190 = vst [vmem:[%s188] sm:%s180] %v189
            $region67: #{custom-call.12} parent=61 // loop_footer
              %s186 = sadd.s32 1, %s182
            $region68: #{custom-call.12} parent=61 // loop_footer_branch
              %181 = sbr.rel target = $region64
            $region69: #{custom-call.12} parent=61 // loop_exit
              _
          $region62: #{custom-call.12} parent=53 // pred_fallthru
            _
        $region54: #{custom-call.12} parent=49 // pred_fallthru
          _
        %205 = vnop
      $region50: #{custom-call.12} parent=5 // pred_fallthru
        _
      %p206 = scmp.le.s32.totalorder 2, %s3
      // Predicated region
      $region81: #{custom-call.12} parent=5 // pred_check
        %p207 = pneg %p206
      $region82: #{custom-call.12} parent=5 // pred_check_branch
        %209 = sbr.rel (%p207) target = $region84
      $region83: #{custom-call.12} parent=5 // pred_region
        %s210 = ssub.s32 %s3, 2
        %s211 = sand.u32 %s9, 1
        %s212 = sand.u32 %s9, 1
        %s213 = smul.addr %s212, 2
        %s214 = scalar_lea.vmem [#allocation3], %s213
      $region84: #{custom-call.12} parent=5 // pred_fallthru
        _
    $region6: #{custom-call.12} parent=1 // loop_footer
      %s7 = sadd.s32 1, %s3
    $region7: #{custom-call.12} parent=1 // loop_footer_branch
      %2 = sbr.rel target = $region3
    $region8: #{custom-call.12} parent=1 // loop_exit
      _

// kernel: custom-call.13
$region0: #{custom-call.13}
  %s0 = inlined_call_operand.vmem [shape: f32[3,1,2,2], index: 0, kind: input, shape index: {}]
  %s1 = inlined_call_operand.vmem [shape: f32[3,1,2,2], index: 1, kind: output, shape index: {}]
  $region1: #{custom-call.13} parent=0
    #allocation0 [shape = 'u8[4096]{0}', space=vmem, size = 0x1000, scoped, tag = 'operand span for operand 0']
    #allocation1 [shape = 'u8[2048]{0}', space=vmem, size = 0x800, scoped, tag = 'packed  for operand 0']
    #allocation2 [shape = 'u8[4096]{0}', space=vmem, size = 0x1000, scoped, tag = 'operand span for operand 1']
    #allocation3 [shape = 'u8[2048]{0}', space=vmem, size = 0x800, scoped, tag = 'packed  for operand 1']
    loop: start=0, step=1, limit=5
    $region2: #{custom-call.13} parent=1 // loop_pre_header
      _
    $region3: #{custom-call.13} parent=1 // loop_header
      %s3 = sphi 0, %s7
      %p4 = scmp.ge.s32.totalorder %s3, 5
      %s10 = sphi 0, %s36
      %s11 = sphi 0, %s32
      %s12 = sphi 0, %s28
      %s13 = sphi 0, %s24
      %s14 = sphi 0, %s10
      %s15 = sphi 0, %s11
      %s16 = sphi 0, %s12
      %s17 = sphi 0, %s13
      %s18 = sphi 0, %s14
      %s19 = sphi 0, %s15
      %s20 = sphi 0, %s16
      %s21 = sphi 0, %s17
    $region4: #{custom-call.13} parent=1 // loop_header_branch
      %6 = sbr.rel (%p4) target = $region8
    $region5: #{custom-call.13} parent=1 // loop_body
      %s8 = ssub.s32 %s3, 1
      %s9 = ssub.s32 %s3, 2
      %s22 = sadd.s32 1, %s13
      %p23 = scmp.ge.s32.totalorder %s22, 1
      %s24 = scalar_select %p23, 0, %s22
      %s25 = sadd.s32 1, %s12
      %s26 = scalar_select %p23, %s25, %s12
      %p27 = scmp.ge.s32.totalorder %s26, 1
      %s28 = scalar_select %p27, 0, %s26
      %s29 = sadd.s32 1, %s11
      %s30 = scalar_select %p27, %s29, %s11
      %p31 = scmp.ge.s32.totalorder %s30, 1
      %s32 = scalar_select %p31, 0, %s30
      %s33 = sadd.s32 1, %s10
      %s34 = scalar_select %p31, %s33, %s10
      %p35 = scmp.ge.s32.totalorder %s34, 3
      %s36 = scalar_select %p35, 0, %s34
      %p37 = scmp.le.s32.totalorder 1, %s3
      %p38 = scmp.lt.s32.totalorder %s3, 4
      %p39 = pnand %p37, %p38
      %p40 = pneg %p39
      // Predicated region
      $region9: #{custom-call.13} parent=5 // pred_check
        _
      $region10: #{custom-call.13} parent=5 // pred_check_branch
        %42 = sbr.rel (%p39) target = $region12
      $region11: #{custom-call.13} parent=5 // pred_region
        %s43 = ssub.s32 %s3, 1
      $region12: #{custom-call.13} parent=5 // pred_fallthru
        _
      %p44 = scmp.lt.s32.totalorder %s3, 3
      // Predicated region
      $region13: #{custom-call.13} parent=5 // pred_check
        %p45 = pneg %p44
      $region14: #{custom-call.13} parent=5 // pred_check_branch
        %47 = sbr.rel (%p45) target = $region16
      $region15: #{custom-call.13} parent=5 // pred_region
        %s48 = sand.u32 %s3, 1
        %s49 = sand.u32 %s3, 1
        %s50 = smul.addr %s49, 2
        %s51 = scalar_lea.vmem [#allocation1], %s50
        %s52 = sadd.s32 %s13, %s12
        %s53 = sadd.s32 %s52, %s11
        %s54 = sadd.s32 %s53, %s10
        %s55 = smul.addr %s54, 2
        %s56 = scalar_lea.vmem %s0, %s55
        // Predicated region
        $region17: #{custom-call.13} parent=15 // pred_check
          _
        $region18: #{custom-call.13} parent=15 // pred_check_branch
          %58 = sbr.rel (0) target = $region20
        $region19: #{custom-call.13} parent=15 // pred_region
          // Predicated region
          $region21: #{custom-call.13} parent=19 // pred_check
            _
          $region22: #{custom-call.13} parent=19 // pred_check_branch
            %60 = sbr.rel target = $region24
          $region23: #{custom-call.13} parent=19 // pred_region
            // Predicated region
            $region36: #{custom-call.13} parent=23 // pred_check
              _
            $region37: #{custom-call.13} parent=23 // pred_check_branch
              %76 = sbr.rel (0) target = $region39
            $region38: #{custom-call.13} parent=23 // pred_region
              %s78 = ssub.s32 4, 1
              loop: start=0, step=1, limit=1
              $region40: #{custom-call.13} parent=38 // loop_pre_header
                _
              $region41: #{custom-call.13} parent=38 // loop_header
                %s80 = sphi 0, %s84
                %p81 = scmp.ge.s32.totalorder %s80, 1
                %s85 = sphi %s56, %s56
                %s86 = sphi %s51, %s51
              $region42: #{custom-call.13} parent=38 // loop_header_branch
                %83 = sbr.rel (%p81) target = $region46
              $region43: #{custom-call.13} parent=38 // loop_body
                %v87 = vld [vmem:[%s85] sm:%s78]
                %88 = vst [vmem:[%s86] sm:%s78] %v87
              $region44: #{custom-call.13} parent=38 // loop_footer
                %s84 = sadd.s32 1, %s80
              $region45: #{custom-call.13} parent=38 // loop_footer_branch
                %79 = sbr.rel target = $region41
              $region46: #{custom-call.13} parent=38 // loop_exit
                _
            $region39: #{custom-call.13} parent=23 // pred_fallthru
              _
          $region24: #{custom-call.13} parent=19 // pred_fallthru
            _
          // Predicated region
          $region25: #{custom-call.13} parent=19 // pred_check
            _
          $region26: #{custom-call.13} parent=19 // pred_check_branch
            %62 = sbr.rel (0) target = $region28
          $region27: #{custom-call.13} parent=19 // pred_region
            %s64 = ssub.s32 4, 1
            loop: start=0, step=1, limit=1
            $region29: #{custom-call.13} parent=27 // loop_pre_header
              _
            $region30: #{custom-call.13} parent=27 // loop_header
              %s66 = sphi 0, %s70
              %p67 = scmp.ge.s32.totalorder %s66, 1
              %s71 = sphi %s56, %s56
              %s72 = sphi %s51, %s51
            $region31: #{custom-call.13} parent=27 // loop_header_branch
              %69 = sbr.rel (%p67) target = $region35
            $region32: #{custom-call.13} parent=27 // loop_body
              %v73 = vld [vmem:[%s71] sm:%s64]
              %74 = vst [vmem:[%s72] sm:%s64] %v73
            $region33: #{custom-call.13} parent=27 // loop_footer
              %s70 = sadd.s32 1, %s66
            $region34: #{custom-call.13} parent=27 // loop_footer_branch
              %65 = sbr.rel target = $region30
            $region35: #{custom-call.13} parent=27 // loop_exit
              _
          $region28: #{custom-call.13} parent=19 // pred_fallthru
            _
        $region20: #{custom-call.13} parent=15 // pred_fallthru
          _
        %89 = vnop
      $region16: #{custom-call.13} parent=5 // pred_fallthru
        _
      %p90 = scmp.le.s32.totalorder 1, %s3
      %p91 = scmp.lt.s32.totalorder %s3, 4
      %p92 = pnand %p90, %p91
      %p93 = pneg %p92
      // Predicated region
      $region47: #{custom-call.13} parent=5 // pred_check
        _
      $region48: #{custom-call.13} parent=5 // pred_check_branch
        %95 = sbr.rel (%p92) target = $region50
      $region49: #{custom-call.13} parent=5 // pred_region
        #allocation4 [shape = 'f32[2,2]{1,0}', space=vmem, size = 0x1000, scoped, tag = 'rescaled input a']
        %s96 = ssub.s32 %s3, 1
        %s97 = sand.u32 %s8, 1
        %s98 = sand.u32 %s8, 1
        %s99 = smul.addr %s98, 2
        %s100 = scalar_lea.vmem [#allocation1], %s99
        %s101 = sand.u32 %s8, 1
        %s102 = sand.u32 %s8, 1
        %s103 = smul.addr %s102, 2
        %s104 = scalar_lea.vmem [#allocation1], %s103
        %s105 = sand.u32 %s8, 1
        %s106 = sand.u32 %s8, 1
        %s107 = smul.addr %s106, 2
        %s108 = scalar_lea.vmem [#allocation3], %s107
        %s110 = sshll.u32 1, 2
        %s111 = ssub.s32 %s110, 1
        %v112 = vld [vmem:[%s104] sm:%s111]
        %113 = vst [vmem:[#allocation0] sm:%s111] %v112
        %v114 = vlaneseq
        %v115 = vand.u32 %v114, 127
        %vm116 = vcmp.lt.s32.totalorder %v115, 2
        %v117 = vlaneseq
        %v118 = vshrl.u32 %v117, 7
        %vm120 = vcmp.eq.s32.totalorder %v118, %v115
        %v121 = vld [vmem:[#allocation0] sm:$0xff]
        %v122 = vsel %vm120, %v121, 0.0
        %123 = vadd.xlane.f32.xlu0 %v122
        %v124 = vpop.xlane.xlu0 %123
        %vm125 = vcmp.ge.s32.totalorder %v118, %v115
        %vm126 = vmand %vm125, %vm116
        %v127 = vsel %vm126, %v121, 0.0
        %v128 = vrcp.pop %v124
        %v129 = vmul.f32 %v127, %v128
        %130 = vst [vmem:[#allocation4] sm:$0xff] %v129
        %v131 = vlaneseq
        %v132 = vand.u32 %v131, 127
        %v133 = vlaneseq
        %v134 = vshrl.u32 %v133, 7
        %vm136 = vcmp.eq.s32.totalorder %v132, %v134
        %v137 = vlaneseq
        %v138 = vand.u32 %v137, 127
        %vm139 = vcmp.eq.s32.totalorder %v138, 0
        %v140 = vsel %vm139, 1.0, -1.0
        %v141 = vsel %vm136, %v140, 0.0
        %s142 = scalar_lea.vmem [#allocation4], 1
        %v143 = vld [vmem:[%s142] ss:$0 sm:$0xff]
        %v144 = vxor.u32 %v143, 2147483648
        %v145 = vlaneseq
        %v146 = vand.u32 %v145, 127
        %vm147 = vcmp.eq.s32.totalorder %v146, 1
        %v148 = vmul.f32 %v144, %v141
        %149 = vadd.xlane.f32.xlu0 %v148
        %v150 = vpop.xlane.xlu0 %149
        %v151 = vsel %vm147, %v150, %v141
        %v152 = vrcp.pop %v124
        %v153 = vmul.f32 %v151, %v152
        %vm154 = vweird.f32 %v124
        %v155 = vsel %vm154, %v151, %v153
        %156 = vst [vmem:[#allocation2] sm:$0xff] %v155
        %s158 = sshll.u32 1, 2
        %s159 = ssub.s32 %s158, 1
        %v161 = vld [vmem:[#allocation2] sm:%s159]
        %s162 = sshll.u32 1, 2
        %s163 = ssub.s32 %s162, 1
        %164 = vst [vmem:[%s108] sm:%s163] %v161
        %s165 = sand.u32 %s8, 1
        %s166 = sand.u32 %s8, 1
        %s167 = smul.addr %s166, 2
        %s168 = scalar_lea.vmem [#allocation3], %s167
        %s169 = sadd.s32 %s17, %s16
        %s170 = sadd.s32 %s169, %s15
        %s171 = sadd.s32 %s170, %s14
        %s172 = smul.addr %s171, 2
        %s173 = scalar_lea.vmem %s1, %s172
        // Predicated region
        $region51: #{custom-call.13} parent=49 // pred_check
          _
        $region52: #{custom-call.13} parent=49 // pred_check_branch
          %175 = sbr.rel (0) target = $region54
        $region53: #{custom-call.13} parent=49 // pred_region
          // Predicated region
          $region55: #{custom-call.13} parent=53 // pred_check
            _
          $region56: #{custom-call.13} parent=53 // pred_check_branch
            %177 = sbr.rel target = $region58
          $region57: #{custom-call.13} parent=53 // pred_region
            // Predicated region
            $region70: #{custom-call.13} parent=57 // pred_check
              _
            $region71: #{custom-call.13} parent=57 // pred_check_branch
              %193 = sbr.rel (0) target = $region73
            $region72: #{custom-call.13} parent=57 // pred_region
              %s195 = ssub.s32 4, 1
              loop: start=0, step=1, limit=1
              $region74: #{custom-call.13} parent=72 // loop_pre_header
                _
              $region75: #{custom-call.13} parent=72 // loop_header
                %s197 = sphi 0, %s201
                %p198 = scmp.ge.s32.totalorder %s197, 1
                %s202 = sphi %s168, %s168
                %s203 = sphi %s173, %s173
              $region76: #{custom-call.13} parent=72 // loop_header_branch
                %200 = sbr.rel (%p198) target = $region80
              $region77: #{custom-call.13} parent=72 // loop_body
                %v204 = vld [vmem:[%s202] sm:%s195]
                %205 = vst [vmem:[%s203] sm:%s195] %v204
              $region78: #{custom-call.13} parent=72 // loop_footer
                %s201 = sadd.s32 1, %s197
              $region79: #{custom-call.13} parent=72 // loop_footer_branch
                %196 = sbr.rel target = $region75
              $region80: #{custom-call.13} parent=72 // loop_exit
                _
            $region73: #{custom-call.13} parent=57 // pred_fallthru
              _
          $region58: #{custom-call.13} parent=53 // pred_fallthru
            _
          // Predicated region
          $region59: #{custom-call.13} parent=53 // pred_check
            _
          $region60: #{custom-call.13} parent=53 // pred_check_branch
            %179 = sbr.rel (0) target = $region62
          $region61: #{custom-call.13} parent=53 // pred_region
            %s181 = ssub.s32 4, 1
            loop: start=0, step=1, limit=1
            $region63: #{custom-call.13} parent=61 // loop_pre_header
              _
            $region64: #{custom-call.13} parent=61 // loop_header
              %s183 = sphi 0, %s187
              %p184 = scmp.ge.s32.totalorder %s183, 1
              %s188 = sphi %s168, %s168
              %s189 = sphi %s173, %s173
            $region65: #{custom-call.13} parent=61 // loop_header_branch
              %186 = sbr.rel (%p184) target = $region69
            $region66: #{custom-call.13} parent=61 // loop_body
              %v190 = vld [vmem:[%s188] sm:%s181]
              %191 = vst [vmem:[%s189] sm:%s181] %v190
            $region67: #{custom-call.13} parent=61 // loop_footer
              %s187 = sadd.s32 1, %s183
            $region68: #{custom-call.13} parent=61 // loop_footer_branch
              %182 = sbr.rel target = $region64
            $region69: #{custom-call.13} parent=61 // loop_exit
              _
          $region62: #{custom-call.13} parent=53 // pred_fallthru
            _
        $region54: #{custom-call.13} parent=49 // pred_fallthru
          _
        %206 = vnop
      $region50: #{custom-call.13} parent=5 // pred_fallthru
        _
      %p207 = scmp.le.s32.totalorder 2, %s3
      // Predicated region
      $region81: #{custom-call.13} parent=5 // pred_check
        %p208 = pneg %p207
      $region82: #{custom-call.13} parent=5 // pred_check_branch
        %210 = sbr.rel (%p208) target = $region84
      $region83: #{custom-call.13} parent=5 // pred_region
        %s211 = ssub.s32 %s3, 2
        %s212 = sand.u32 %s9, 1
        %s213 = sand.u32 %s9, 1
        %s214 = smul.addr %s213, 2
        %s215 = scalar_lea.vmem [#allocation3], %s214
      $region84: #{custom-call.13} parent=5 // pred_fallthru
        _
    $region6: #{custom-call.13} parent=1 // loop_footer
      %s7 = sadd.s32 1, %s3
    $region7: #{custom-call.13} parent=1 // loop_footer_branch
      %2 = sbr.rel target = $region3
    $region8: #{custom-call.13} parent=1 // loop_exit
      _

// kernel: k_g_forward.1
$region0: #{k_g_forward.1}
  #allocation0 [shape = 'u32[]', space=smem, size = 0x4, offset = 0x4, fixed_abs, tag = 'smem constant byte address 0x4 - core index']
  #allocation1 [shape = 'u32[144,128]{1,0:T(1,128)}', space=vmem, size = 0x12000, scoped, tag = 'internal scratch']
  %s0 = inlined_call_operand.vmem [shape: f32[2,2048], index: 0, kind: input, shape index: {}]
  %s1 = inlined_call_operand.vmem [shape: f32[3,3], index: 1, kind: input, shape index: {}]
  %s2 = inlined_call_operand.vmem [shape: f32[3,1], index: 2, kind: input, shape index: {}]
  %s3 = inlined_call_operand.vmem [shape: f32[3,2048], index: 3, kind: output, shape index: {}]
  %s4 = sld [smem:[#allocation0]]
  $region45: #{k_g_forward.1} parent=0
    _
  %s6 = ssub.s32 1, %s4
  %s7 = scalar_select 0, %s6, %s4
  loop: start=0, step=1, limit=10
  $region2: #{k_g_forward.1} parent=0 // loop_pre_header
    _
  $region3: #{k_g_forward.1} parent=0 // loop_header
    %s9 = sphi 0, %s13
    %p10 = scmp.ge.s32.totalorder %s9, 10
    %s16 = sphi 0, %s28
    %s17 = sphi 0, %s24
    %s18 = sphi 0, %s16
    %s19 = sphi 0, %s17
    %s20 = sphi 0, %s18
    %s21 = sphi 0, %s19
    %s31 = sphi 0, %s33
    %s34 = sphi 0, %s31
    %s35 = sphi 0, %s34
    %s51 = sphi 0, %s35
    %s57 = sphi 0, %s59
    %s60 = sphi 0, %s57
    %s61 = sphi 0, %s60
    %s77 = sphi 0, %s61
    %s83 = sphi 0, %s85
    %s86 = sphi 0, %s83
    %s87 = sphi 0, %s86
    %s103 = sphi 0, %s87
    %s111 = sphi 0, %s113
    %s114 = sphi 0, %s111
    %s115 = sphi 0, %s114
    %s131 = sphi 0, %s115
  $region4: #{k_g_forward.1} parent=0 // loop_header_branch
    %12 = sbr.rel (%p10) target = $region8
  $region5: #{k_g_forward.1} parent=0 // loop_body
    %s14 = ssub.s32 %s9, 1
    %s15 = ssub.s32 %s9, 2
    %s22 = sadd.s32 1, %s17
    %p23 = scmp.ge.s32.totalorder %s22, 8
    %s24 = scalar_select %p23, 0, %s22
    %s25 = sadd.s32 1, %s16
    %s26 = scalar_select %p23, %s25, %s16
    %p27 = scmp.ge.s32.totalorder %s26, 1
    %s28 = scalar_select %p27, 0, %s26
    %s29 = ssub.s32 %s17, %s24
    %p30 = scmp.eq.s32.totalorder %s29, 0
    %s32 = sadd.s32 %s31, 1
    %s33 = scalar_select %p30, %s31, %s32
    %p36 = pneg %p30
    %p37 = scmp.eq.s32.totalorder %s9, 7
    %p38 = por %p36, %p37
    %p39 = scmp.ne.s32.totalorder %s31, %s34
    %p40 = scmp.eq.s32.totalorder %s9, 0
    %p41 = por %p39, %p40
    %p42 = scmp.ne.s32.totalorder %s31, %s34
    %p43 = scmp.eq.s32.totalorder %s14, 7
    %p44 = por %p42, %p43
    %p45 = scmp.ne.s32.totalorder %s34, %s35
    %p46 = scmp.eq.s32.totalorder %s14, 0
    %p47 = por %p45, %p46
    %p48 = scmp.ne.s32.totalorder %s34, %s35
    %p49 = scmp.eq.s32.totalorder %s15, 7
    %p50 = por %p48, %p49
    %p52 = scmp.ne.s32.totalorder %s35, %s51
    %p53 = scmp.eq.s32.totalorder %s15, 0
    %p54 = por %p52, %p53
    %s55 = ssub.s32 %s16, %s28
    %p56 = scmp.eq.s32.totalorder %s55, 0
    %s58 = sadd.s32 %s57, 1
    %s59 = scalar_select %p56, %s57, %s58
    %p62 = pneg %p56
    %p63 = scmp.eq.s32.totalorder %s9, 7
    %p64 = por %p62, %p63
    %p65 = scmp.ne.s32.totalorder %s57, %s60
    %p66 = scmp.eq.s32.totalorder %s9, 0
    %p67 = por %p65, %p66
    %p68 = scmp.ne.s32.totalorder %s57, %s60
    %p69 = scmp.eq.s32.totalorder %s14, 7
    %p70 = por %p68, %p69
    %p71 = scmp.ne.s32.totalorder %s60, %s61
    %p72 = scmp.eq.s32.totalorder %s14, 0
    %p73 = por %p71, %p72
    %p74 = scmp.ne.s32.totalorder %s60, %s61
    %p75 = scmp.eq.s32.totalorder %s15, 7
    %p76 = por %p74, %p75
    %p78 = scmp.ne.s32.totalorder %s61, %s77
    %p79 = scmp.eq.s32.totalorder %s15, 0
    %p80 = por %p78, %p79
    %s81 = ssub.s32 %s16, %s28
    %p82 = scmp.eq.s32.totalorder %s81, 0
    %s84 = sadd.s32 %s83, 1
    %s85 = scalar_select %p82, %s83, %s84
    %p88 = pneg %p82
    %p89 = scmp.eq.s32.totalorder %s9, 7
    %p90 = por %p88, %p89
    %p91 = scmp.ne.s32.totalorder %s83, %s86
    %p92 = scmp.eq.s32.totalorder %s9, 0
    %p93 = por %p91, %p92
    %p94 = scmp.ne.s32.totalorder %s83, %s86
    %p95 = scmp.eq.s32.totalorder %s14, 7
    %p96 = por %p94, %p95
    %p97 = scmp.ne.s32.totalorder %s86, %s87
    %p98 = scmp.eq.s32.totalorder %s14, 0
    %p99 = por %p97, %p98
    %p100 = scmp.ne.s32.totalorder %s86, %s87
    %p101 = scmp.eq.s32.totalorder %s15, 7
    %p102 = por %p100, %p101
    %p104 = scmp.ne.s32.totalorder %s87, %s103
    %p105 = scmp.eq.s32.totalorder %s15, 0
    %p106 = por %p104, %p105
    %s107 = ssub.s32 %s16, %s28
    %s108 = ssub.s32 %s17, %s24
    %s109 = sor.u32 %s107, %s108
    %p110 = scmp.eq.s32.totalorder %s109, 0
    %s112 = sadd.s32 %s111, 1
    %s113 = scalar_select %p110, %s111, %s112
    %p116 = pneg %p110
    %p117 = scmp.eq.s32.totalorder %s9, 7
    %p118 = por %p116, %p117
    %p119 = scmp.ne.s32.totalorder %s111, %s114
    %p120 = scmp.eq.s32.totalorder %s9, 0
    %p121 = por %p119, %p120
    %p122 = scmp.ne.s32.totalorder %s111, %s114
    %p123 = scmp.eq.s32.totalorder %s14, 7
    %p124 = por %p122, %p123
    %p125 = scmp.ne.s32.totalorder %s114, %s115
    %p126 = scmp.eq.s32.totalorder %s14, 0
    %p127 = por %p125, %p126
    %p128 = scmp.ne.s32.totalorder %s114, %s115
    %p129 = scmp.eq.s32.totalorder %s15, 7
    %p130 = por %p128, %p129
    %p132 = scmp.ne.s32.totalorder %s115, %s131
    %p133 = scmp.eq.s32.totalorder %s15, 0
    %p134 = por %p132, %p133
    %p135 = scmp.le.s32.totalorder 1, %s9
    %p136 = scmp.lt.s32.totalorder %s9, 9
    %p137 = pnand %p135, %p136
    %p138 = pneg %p137
    // Predicated region
    $region9: #{k_g_forward.1} parent=5 // pred_check
      _
    $region10: #{k_g_forward.1} parent=5 // pred_check_branch
      %140 = sbr.rel (%p137) target = $region12
    $region11: #{k_g_forward.1} parent=5 // pred_region
      %s141 = ssub.s32 %s9, 1
      // Predicated region
      $region13: #{k_g_forward.1} parent=11 // pred_check
        %p142 = pneg %p73
      $region14: #{k_g_forward.1} parent=11 // pred_check_branch
        %144 = sbr.rel (%p142) target = $region16
      $region15: #{k_g_forward.1} parent=11 // pred_region
        %p145 = scmp.lt.s32.totalorder %s18, 0
        %s146 = scalar_select %p145, %s18, 0
        %s147 = smul.addr %s146, 4
        %s148 = scalar_lea.vmem %s1, %s147
      $region16: #{k_g_forward.1} parent=11 // pred_fallthru
        _
      // Predicated region
      $region17: #{k_g_forward.1} parent=11 // pred_check
        %p149 = pneg %p99
      $region18: #{k_g_forward.1} parent=11 // pred_check_branch
        %151 = sbr.rel (%p149) target = $region20
      $region19: #{k_g_forward.1} parent=11 // pred_region
        %p152 = scmp.lt.s32.totalorder %s18, 0
        %s153 = scalar_select %p152, %s18, 0
        %s154 = smul.addr %s153, 4
        %s155 = scalar_lea.vmem %s2, %s154
      $region20: #{k_g_forward.1} parent=11 // pred_fallthru
        _
    $region12: #{k_g_forward.1} parent=5 // pred_fallthru
      _
    %p156 = scmp.lt.s32.totalorder %s9, 8
    // Predicated region
    $region21: #{k_g_forward.1} parent=5 // pred_check
      %p157 = pneg %p156
    $region22: #{k_g_forward.1} parent=5 // pred_check_branch
      %159 = sbr.rel (%p157) target = $region24
    $region23: #{k_g_forward.1} parent=5 // pred_region
      // Predicated region
      $region25: #{k_g_forward.1} parent=23 // pred_check
        %p160 = pneg %p41
      $region26: #{k_g_forward.1} parent=23 // pred_check_branch
        %162 = sbr.rel (%p160) target = $region28
      $region27: #{k_g_forward.1} parent=23 // pred_region
        %s163 = smul.u32 2, %s17
        %p164 = scmp.lt.s32.totalorder %s163, 15
        %s165 = scalar_select %p164, %s163, 15
        %s166 = smul.addr %s165, 2
        %s167 = scalar_lea.vmem %s0, %s166
        %s168 = smul.u32 2, %s17
      $region28: #{k_g_forward.1} parent=23 // pred_fallthru
        _
    $region24: #{k_g_forward.1} parent=5 // pred_fallthru
      _
    %p169 = scmp.le.s32.totalorder 1, %s9
    %p170 = scmp.lt.s32.totalorder %s9, 9
    %p171 = pnand %p169, %p170
    %p172 = pneg %p171
    // Predicated region
    $region29: #{k_g_forward.1} parent=5 // pred_check
      _
    $region30: #{k_g_forward.1} parent=5 // pred_check_branch
      %174 = sbr.rel (%p171) target = $region32
    $region31: #{k_g_forward.1} parent=5 // pred_region
      %s175 = ssub.s32 %s9, 1
      %s176 = smul.u32 2, %s19
      %p177 = scmp.lt.s32.totalorder %s176, 15
      %s178 = scalar_select %p177, %s176, 15
      %s179 = smul.addr %s178, 2
      %s180 = scalar_lea.vmem %s0, %s179
      %p181 = pneg %p47
      %p182 = pneg %p44
      %p183 = scmp.lt.s32.totalorder %s18, 0
      %s184 = scalar_select %p183, %s18, 0
      %s185 = smul.addr %s184, 4
      %s186 = scalar_lea.vmem %s1, %s185
      %p187 = pneg %p73
      %p188 = pneg %p70
      %p189 = scmp.lt.s32.totalorder %s18, 0
      %s190 = scalar_select %p189, %s18, 0
      %s191 = smul.addr %s190, 4
      %s192 = scalar_lea.vmem %s2, %s191
      %p193 = pneg %p99
      %p194 = pneg %p96
      %p195 = pneg %p127
      %p196 = pneg %p124
      %s197 = smul.u32 2, %s19
      %p198 = scmp.lt.s32.totalorder %s18, 0
      %s199 = scalar_select %p198, %s18, 0
      %p200 = scmp.lt.s32.totalorder %s197, 15
      %s201 = scalar_select %p200, %s197, 15
      %s202 = smul.addr %s199, 16
      %s203 = sadd.s32 %s201, %s202
      %s204 = smul.addr %s203, 4
      %s205 = scalar_lea.vmem %s3, %s204
      %s206 = smul.u32 2, %s19
      %p207 = scmp.lt.s32.totalorder %s206, 15
      %s208 = scalar_select %p207, %s206, 15
      %s209 = smul.addr %s208, 2
      %s210 = scalar_lea.vmem %s0, %s209
      %s211 = smul.u32 2, %s19
      %p212 = scmp.lt.s32.totalorder %s18, 0
      %s213 = scalar_select %p212, %s18, 0
      %s214 = smul.addr %s213, 4
      %s215 = scalar_lea.vmem %s1, %s214
      %p216 = scmp.lt.s32.totalorder %s18, 0
      %s217 = scalar_select %p216, %s18, 0
      %s218 = smul.addr %s217, 4
      %s219 = scalar_lea.vmem %s2, %s218
      %s220 = smul.u32 2, %s19
      %p221 = scmp.lt.s32.totalorder %s18, 0
      %s222 = scalar_select %p221, %s18, 0
      %p223 = scmp.lt.s32.totalorder %s220, 15
      %s224 = scalar_select %p223, %s220, 15
      %s225 = smul.addr %s222, 16
      %s226 = sadd.s32 %s224, %s225
      %s227 = smul.addr %s226, 4
      %s228 = scalar_lea.vmem %s3, %s227
      %s229 = smul.u32 2, %s19
      %v230 = vld [vmem:[%s210] sm:$0xf]
      %v231 = vld [vmem:[%s215] sm:$0x7]
      %v232 = vld [vmem:[%s219] sm:$0x7]
      %v233 = vmul.f32 %v230, %v230
      %235 = vset.pattern.permute.xlu0 0
      %236 = vperm.xlu0 %235, %v231
      %v237 = vpop.permute.xlu0 %236
      %v240 = vlaneseq
      %v241 = vshrl.u32 %v240, 7
      %v242 = vsub.s32 0, %v241
      %v243 = vrot.slane %v233, %v242
      %v244 = vlaneseq
      %v245 = vshrl.u32 %v244, 7
      %v246 = vsub.s32 2, %v245
      %v247 = vrot.slane %v233, %v246
      %v250 = vlaneseq
      %v251 = vshrl.u32 %v250, 7
      %v252 = vsub.s32 0, %v251
      %v253 = vrot.slane %v243, %v252
      %v254 = vlaneseq
      %v255 = vshrl.u32 %v254, 7
      %v256 = vsub.s32 0, %v255
      %v257 = vrot.slane %v247, %v256
      %v258 = vmul.f32 %v237, %v253
      %v259 = vmul.f32 %v237, %v257
      %v260 = vadd.f32 %v258, 0.0
      %v261 = vadd.f32 %v259, 0.0
      %v263 = vrot.slane %v230, 7
      %v264 = vrot.slane %v263, 2
      %v266 = vmul.f32 %v230, %v264
      %267 = vset.pattern.permute.xlu0 1
      %268 = vperm.xlu0 %267, %v231
      %v269 = vpop.permute.xlu0 %268
      %v272 = vlaneseq
      %v273 = vshrl.u32 %v272, 7
      %v274 = vsub.s32 0, %v273
      %v275 = vrot.slane %v266, %v274
      %v276 = vlaneseq
      %v277 = vshrl.u32 %v276, 7
      %v278 = vsub.s32 2, %v277
      %v279 = vrot.slane %v266, %v278
      %v282 = vlaneseq
      %v283 = vshrl.u32 %v282, 7
      %v284 = vsub.s32 0, %v283
      %v285 = vrot.slane %v275, %v284
      %v286 = vlaneseq
      %v287 = vshrl.u32 %v286, 7
      %v288 = vsub.s32 0, %v287
      %v289 = vrot.slane %v279, %v288
      %v290 = vmul.f32 %v269, %v285
      %v291 = vmul.f32 %v269, %v289
      %v292 = vadd.f32 %v260, %v290
      %v293 = vadd.f32 %v261, %v291
      %294 = vset.pattern.permute.xlu0 2
      %295 = vperm.xlu0 %294, %v231
      %v296 = vpop.permute.xlu0 %295
      %v298 = vlaneseq
      %v299 = vshrl.u32 %v298, 7
      %v300 = vsub.s32 1, %v299
      %v301 = vrot.slane %v233, %v300
      %v302 = vlaneseq
      %v303 = vshrl.u32 %v302, 7
      %v304 = vsub.s32 3, %v303
      %v305 = vrot.slane %v233, %v304
      %v308 = vlaneseq
      %v309 = vshrl.u32 %v308, 7
      %v310 = vsub.s32 1, %v309
      %v311 = vrot.slane %v301, %v310
      %v312 = vlaneseq
      %v313 = vshrl.u32 %v312, 7
      %v314 = vsub.s32 1, %v313
      %v315 = vrot.slane %v305, %v314
      %v316 = vmul.f32 %v296, %v311
      %v317 = vmul.f32 %v296, %v315
      %v318 = vadd.f32 %v292, %v316
      %v319 = vadd.f32 %v293, %v317
      %v320 = vmul.f32 %v318, 1.442695
      %v321 = vpow.pop %v320
      %v322 = vmul.f32 %v319, 1.442695
      %v323 = vpow.pop %v322
      %325 = vset.pattern.permute.xlu0 0
      %326 = vperm.xlu0 %325, %v232
      %v327 = vpop.permute.xlu0 %326
      %v329 = vmul.f32 %v327, %v321
      %v330 = vmul.f32 %v327, %v323
      %v333 = vcombine.low %v329, %v330
      %335 = vst [vmem:[%s228] sm:$0x77] %v333
      %s336 = smul.u32 2, %s19
      %p337 = scmp.lt.s32.totalorder %s18, 0
      %s338 = scalar_select %p337, %s18, 0
      %p339 = scmp.lt.s32.totalorder %s336, 15
      %s340 = scalar_select %p339, %s336, 15
      %s341 = smul.addr %s338, 16
      %s342 = sadd.s32 %s340, %s341
      %s343 = smul.addr %s342, 4
      %s344 = scalar_lea.vmem %s3, %s343
      // Predicated region
      $region33: #{k_g_forward.1} parent=31 // pred_check
        %p345 = pneg %p124
      $region34: #{k_g_forward.1} parent=31 // pred_check_branch
        %347 = sbr.rel (%p345) target = $region36
      $region35: #{k_g_forward.1} parent=31 // pred_region
        %s348 = smul.u32 2, %s19
      $region36: #{k_g_forward.1} parent=31 // pred_fallthru
        _
    $region32: #{k_g_forward.1} parent=5 // pred_fallthru
      _
    %p349 = scmp.le.s32.totalorder 2, %s9
    // Predicated region
    $region37: #{k_g_forward.1} parent=5 // pred_check
      %p350 = pneg %p349
    $region38: #{k_g_forward.1} parent=5 // pred_check_branch
      %352 = sbr.rel (%p350) target = $region40
    $region39: #{k_g_forward.1} parent=5 // pred_region
      %s353 = ssub.s32 %s9, 2
      // Predicated region
      $region41: #{k_g_forward.1} parent=39 // pred_check
        %p354 = pneg %p130
      $region42: #{k_g_forward.1} parent=39 // pred_check_branch
        %356 = sbr.rel (%p354) target = $region44
      $region43: #{k_g_forward.1} parent=39 // pred_region
        %s357 = smul.u32 2, %s21
        %p358 = scmp.lt.s32.totalorder %s20, 0
        %s359 = scalar_select %p358, %s20, 0
        %p360 = scmp.lt.s32.totalorder %s357, 15
        %s361 = scalar_select %p360, %s357, 15
        %s362 = smul.addr %s359, 16
        %s363 = sadd.s32 %s361, %s362
        %s364 = smul.addr %s363, 4
        %s365 = scalar_lea.vmem %s3, %s364
      $region44: #{k_g_forward.1} parent=39 // pred_fallthru
        _
    $region40: #{k_g_forward.1} parent=5 // pred_fallthru
      _
  $region6: #{k_g_forward.1} parent=0 // loop_footer
    %s13 = sadd.s32 1, %s9
  $region7: #{k_g_forward.1} parent=0 // loop_footer_branch
    %8 = sbr.rel target = $region3
  $region8: #{k_g_forward.1} parent=0 // loop_exit
    _

</llo_original>
